<compile_context>
chip_gen: v7x
topology: tpu7x:2x2x1
jax: 0.10.0
libtpu: 0.0.40
codegen_flags: <defaults>
</compile_context>

<pallas_src>
import math
import functools

import jax
import jax.numpy as jnp
from jax.experimental import pallas as pl
from jax.experimental.pallas import tpu as pltpu


# -----------------------------------------------------------------------------
# Kernel: one grid step == `bb` batch elements.  Attention, residuals,
# layernorms and the FFN are all computed in VMEM inside the kernel body.
# -----------------------------------------------------------------------------
def _xmt_block_kernel(
    q_ref,      # (bb, Lq, D)   f32
    kv_ref,     # (bb, Lkv, D)  f32
    qw_ref,     # (D, D)        bf16  q projection (scale folded in)
    qb_ref,     # (1, D)        f32   q bias       (scale folded in)
    kvw_ref,    # (D, 2D)       bf16  fused [K | V] projection
    kvb_ref,    # (1, 2D)       f32
    ow_ref,     # (H, hd, D)    bf16  attention output projection, per head
    ob_ref,     # (1, D)        f32
    g1_ref,     # (1, D)        f32   norm1 gamma
    be1_ref,    # (1, D)        f32   norm1 beta
    w1_ref,     # (D, 4D)       bf16  ffn linear 1
    fb1_ref,    # (1, 4D)       f32
    w2_ref,     # (4D, D)       bf16  ffn linear 2
    fb2_ref,    # (1, D)        f32
    g2_ref,     # (1, D)        f32   norm2 gamma
    be2_ref,    # (1, D)        f32   norm2 beta
    o_ref,      # (bb, Lq, D)
    *,
    n_heads: int,
):
    f32 = jnp.float32
    bf16 = jnp.bfloat16

    bb, Lq, D = q_ref.shape
    Lkv = kv_ref.shape[1]
    hd = D // n_heads

    # Rows of q / kv for all fused batch elements (leading-dim merge is free).
    x = q_ref[...].reshape(bb * Lq, D).astype(f32)        # (bb*Lq, D)
    kvx = kv_ref[...].reshape(bb * Lkv, D).astype(f32)    # (bb*Lkv, D)

    # ---- projections: one matmul for q, one fused matmul for k|v -----------
    qp = jnp.dot(x.astype(bf16), qw_ref[...],
                 preferred_element_type=f32) + qb_ref[...]          # (bb*Lq, D)
    kvp = jnp.dot(kvx.astype(bf16), kvw_ref[...],
                  preferred_element_type=f32) + kvb_ref[...]        # (bb*Lkv, 2D)

    qp3 = qp.reshape(bb, Lq, D)                                     # f32
    kp3 = kvp[:, :D].reshape(bb, Lkv, D)
    vp3 = kvp[:, D:].reshape(bb, Lkv, D)

    # ---- per-head attention; out-projection fused into the epilogue --------
    attn = jnp.zeros((bb * Lq, D), f32)
    for h in range(n_heads):                                        # static
        sl = slice(h * hd, (h + 1) * hd)
        qh = qp3[:, :, sl].astype(bf16)                             # (bb, Lq, hd)
        kh = kp3[:, :, sl].astype(bf16)                             # (bb, Lkv, hd)
        vh = vp3[:, :, sl].astype(bf16)                             # (bb, Lkv, hd)

        s = jnp.einsum("bqd,bkd->bqk", qh, kh,
                       preferred_element_type=f32)                  # (bb, Lq, Lkv)
        s = s - jnp.max(s, axis=-1, keepdims=True)
        p = jnp.exp(s)
        p = p * pl.reciprocal(jnp.sum(p, axis=-1, keepdims=True), approx=True)

        oh = jnp.einsum("bqk,bkd->bqd", p.astype(bf16), vh,
                        preferred_element_type=f32)                 # (bb, Lq, hd)
        # Fused output projection: attn += o_h @ W_out[h]   (no concat).
        attn = attn + jnp.dot(oh.reshape(bb * Lq, hd).astype(bf16), ow_ref[h],
                              preferred_element_type=f32)
    attn = attn + ob_ref[...]

    def layer_norm(v, gamma, beta):
        mean = jnp.mean(v, axis=-1, keepdims=True)
        cen = v - mean
        var = jnp.mean(cen * cen, axis=-1, keepdims=True)
        return cen * jax.lax.rsqrt(var + 1e-5) * gamma + beta

    # ---- residual + norm1 ---------------------------------------------------
    x1 = layer_norm(x + attn, g1_ref[...], be1_ref[...])            # (bb*Lq, D)

    # ---- FFN: Linear(D,4D) -> ReLU -> (Dropout = identity) -> Linear(4D,D) --
    h1 = jnp.dot(x1.astype(bf16), w1_ref[...],
                 preferred_element_type=f32) + fb1_ref[...]
    h1 = jnp.maximum(h1, 0.0)
    ffn = jnp.dot(h1.astype(bf16), w2_ref[...],
                  preferred_element_type=f32) + fb2_ref[...]

    # ---- residual + norm2 ---------------------------------------------------
    out = layer_norm(x1 + ffn, g2_ref[...], be2_ref[...])
    o_ref[...] = out.reshape(bb, Lq, D).astype(o_ref.dtype)


# -----------------------------------------------------------------------------
# Wrapper: weight pre-processing (split / scale-fold / bf16 cast), batch-tiled
# grid, BlockSpecs, cost estimate and VMEM budget.
# -----------------------------------------------------------------------------
def shared_cross_modal_transformer_block(q, kv, params, n_heads,
                                         *, target_rows_per_step=256):
    B, Lq, D = q.shape
    _, Lkv, _ = kv.shape
    assert D % n_heads == 0, "embed dim must be divisible by n_heads"
    hd = D // n_heads
    scale = 1.0 / math.sqrt(hd)
    f32, bf16 = jnp.float32, jnp.bfloat16

    # Split packed in-projection into q and fused k|v parts; fold the attention
    # scale into the q projection; cast matmul weights to bf16 once here.
    in_w, in_b = params["in_w"], params["in_b"]
    q_w = (in_w[:, :D] * scale).astype(bf16)              # (D, D)
    q_b = (in_b[:, :D] * scale).astype(f32)               # (1, D)
    kv_w = in_w[:, D:].astype(bf16)                       # (D, 2D)
    kv_b = in_b[:, D:].astype(f32)                        # (1, 2D)
    out_w_heads = params["out_w"].reshape(n_heads, hd, D).astype(bf16)

    weight_args = (
        q_w, q_b,
        kv_w, kv_b,
        out_w_heads, params["out_b"].astype(f32),
        params["g1"].astype(f32), params["be1"].astype(f32),
        params["w1"].astype(bf16), params["fb1"].astype(f32),
        params["w2"].astype(bf16), params["fb2"].astype(f32),
        params["g2"].astype(f32), params["be2"].astype(f32),
    )

    # Batch-tile size: pack several batch elements per grid step so matmuls
    # see M = bb*Lq rows; bb is the largest divisor of B within the target.
    max_bb = max(1, target_rows_per_step // max(Lq, 1))
    bb = 1
    for cand in range(1, B + 1):
        if B % cand == 0 and cand <= max_bb:
            bb = cand
    grid = (B // bb,)

    def full_spec(arr):
        # Whole (small) weight resident in VMEM; constant index_map.
        return pl.BlockSpec(arr.shape, lambda b: (0,) * arr.ndim)

    in_specs = [
        pl.BlockSpec((bb, Lq, D), lambda b: (b, 0, 0)),
        pl.BlockSpec((bb, Lkv, D), lambda b: (b, 0, 0)),
    ] + [full_spec(w) for w in weight_args]
    out_spec = pl.BlockSpec((bb, Lq, D), lambda b: (b, 0, 0))

    # Advisory cost estimate so XLA schedules around the custom call sensibly.
    mm_flops = 2 * B * (
        Lq * D * D                        # q projection
        + Lkv * D * 2 * D                 # fused k|v projection
        + n_heads * Lq * Lkv * hd * 2     # scores + weighted values
        + Lq * D * D                      # output projection
        + Lq * D * 4 * D * 2              # FFN
    )
    transcendentals = B * (n_heads * Lq * Lkv + n_heads * Lq + 4 * Lq)
    weight_bytes = sum(int(w.size) * w.dtype.itemsize for w in weight_args)
    io_bytes = (q.size + kv.size + B * Lq * D) * 4
    cost = pl.CostEstimate(flops=int(mm_flops),
                           transcendentals=int(transcendentals),
                           bytes_accessed=int(io_bytes + weight_bytes * (B // bb)))

    # VMEM budget: double-buffered activation blocks + resident weights +
    # intermediate headroom; never below the default scoped limit, never above
    # v7x's 64 MiB physical VMEM.
    act_bytes = (bb * Lq * D + bb * Lkv * D + bb * Lq * D) * 4
    live_est = 2 * (act_bytes + weight_bytes) \
        + (bb * Lq * 4 * D + bb * Lkv * 2 * D) * 8
    vmem_limit = int(min(64 * 1024 * 1024, max(32 * 1024 * 1024, live_est)))

    kernel = functools.partial(_xmt_block_kernel, n_heads=n_heads)

    return pl.pallas_call(
        kernel,
        out_shape=jax.ShapeDtypeStruct((B, Lq, D), q.dtype),
        grid_spec=pltpu.PrefetchScalarGridSpec(
            num_scalar_prefetch=0,
            grid=grid,
            in_specs=in_specs,
            out_specs=out_spec,
        ),
        compiler_params=pltpu.CompilerParams(
            dimension_semantics=("parallel",),
            vmem_limit_bytes=vmem_limit,
        ),
        cost_estimate=cost,
    )(q, kv, *weight_args)


# -----------------------------------------------------------------------------
# Deterministic parameter init (shapes implied by the PyTorch __init__).
# Linear weights are stored pre-transposed as (in, out).
# -----------------------------------------------------------------------------
def init_params(key, dim):
    ks = jax.random.split(key, 8)
    s = 0.05
    return {
        # packed q/k/v in-projection, stored (in, out) = (D, 3D)
        "in_w": s * jax.random.normal(ks[0], (dim, 3 * dim), jnp.float32),
        "in_b": s * jax.random.normal(ks[1], (1, 3 * dim), jnp.float32),
        # attention output projection (D, D)
        "out_w": s * jax.random.normal(ks[2], (dim, dim), jnp.float32),
        "out_b": s * jax.random.normal(ks[3], (1, dim), jnp.float32),
        # norm1
        "g1": jnp.ones((1, dim), jnp.float32),
        "be1": jnp.zeros((1, dim), jnp.float32),
        # ffn
        "w1": s * jax.random.normal(ks[4], (dim, 4 * dim), jnp.float32),
        "fb1": s * jax.random.normal(ks[5], (1, 4 * dim), jnp.float32),
        "w2": s * jax.random.normal(ks[6], (4 * dim, dim), jnp.float32),
        "fb2": s * jax.random.normal(ks[7], (1, dim), jnp.float32),
        # norm2
        "g2": jnp.ones((1, dim), jnp.float32),
        "be2": jnp.zeros((1, dim), jnp.float32),
    }


# -----------------------------------------------------------------------------
# Pure-JAX reference mirroring the kernel's bf16-matmul / f32-accumulate recipe
# (layernorm / softmax / residuals in f32), for a sanity check.
# -----------------------------------------------------------------------------
def reference(q, kv, params, n_heads):
    B, Lq, D = q.shape
    hd = D // n_heads
    scale = 1.0 / math.sqrt(hd)
    f32, bf16 = jnp.float32, jnp.bfloat16

    def ln(v, g, b):
        m = jnp.mean(v, axis=-1, keepdims=True)
        c = v - m
        var = jnp.mean(c * c, axis=-1, keepdims=True)
        return c * jax.lax.rsqrt(var + 1e-5) * g + b

    in_w, in_b = params["in_w"], params["in_b"]
    qw = (in_w[:, :D] * scale).astype(bf16)
    qb = in_b[:, :D] * scale
    kvw = in_w[:, D:].astype(bf16)
    kvb = in_b[:, D:]

    qp = jnp.einsum("bld,de->ble", q.astype(bf16), qw,
                    preferred_element_type=f32) + qb
    kvp = jnp.einsum("bld,de->ble", kv.astype(bf16), kvw,
                     preferred_element_type=f32) + kvb
    kp, vp = kvp[..., :D], kvp[..., D:]

    qh = qp.reshape(B, Lq, n_heads, hd).astype(bf16)
    kh = kp.reshape(B, -1, n_heads, hd).astype(bf16)
    vh = vp.reshape(B, -1, n_heads, hd).astype(bf16)
    s = jnp.einsum("bqhd,bkhd->bhqk", qh, kh, preferred_element_type=f32)
    p = jax.nn.softmax(s, axis=-1)
    a = jnp.einsum("bhqk,bkhd->bqhd", p.astype(bf16), vh,
                   preferred_element_type=f32).reshape(B, Lq, D)
    a = jnp.einsum("bld,de->ble", a.astype(bf16),
                   params["out_w"].astype(bf16),
                   preferred_element_type=f32) + params["out_b"]

    x1 = ln(q + a, params["g1"], params["be1"])
    h1 = jnp.maximum(
        jnp.einsum("bld,de->ble", x1.astype(bf16), params["w1"].astype(bf16),
                   preferred_element_type=f32) + params["fb1"], 0.0)
    f = jnp.einsum("bld,de->ble", h1.astype(bf16), params["w2"].astype(bf16),
                   preferred_element_type=f32) + params["fb2"]
    return ln(x1 + f, params["g2"], params["be2"])


if __name__ == "__main__":
    B, Lq, Lkv, D, H = 2, 8, 8, 32, 4

    key = jax.random.PRNGKey(0)
    kq, kkv, kp = jax.random.split(key, 3)
    q = jax.random.normal(kq, (B, Lq, D), jnp.float32)
    kv = jax.random.normal(kkv, (B, Lkv, D), jnp.float32)
    params = init_params(kp, D)

    out = shared_cross_modal_transformer_block(q, kv, params, H)
    out = jax.block_until_ready(out)

    ref = reference(q, kv, params, H)
    assert out.shape == (B, Lq, D)
    err = float(jnp.max(jnp.abs(out - ref)))
    assert err < 2e-2, f"mismatch vs pure-JAX reference: max abs err = {err}"

    print("KERNEL_OK")
</pallas_src>

<mosaic_0001>
module attributes {stable_mosaic.version = 11 : i64} {
  func.func @_xmt_block_kernel(%arg0: i32, %arg1: memref<2x8x32xf32, #tpu.memory_space<vmem>>, %arg2: memref<2x8x32xf32, #tpu.memory_space<vmem>>, %arg3: memref<32x32xbf16, #tpu.memory_space<vmem>>, %arg4: memref<1x32xf32, #tpu.memory_space<vmem>>, %arg5: memref<32x64xbf16, #tpu.memory_space<vmem>>, %arg6: memref<1x64xf32, #tpu.memory_space<vmem>>, %arg7: memref<4x8x32xbf16, #tpu.memory_space<vmem>>, %arg8: memref<1x32xf32, #tpu.memory_space<vmem>>, %arg9: memref<1x32xf32, #tpu.memory_space<vmem>>, %arg10: memref<1x32xf32, #tpu.memory_space<vmem>>, %arg11: memref<32x128xbf16, #tpu.memory_space<vmem>>, %arg12: memref<1x128xf32, #tpu.memory_space<vmem>>, %arg13: memref<128x32xbf16, #tpu.memory_space<vmem>>, %arg14: memref<1x32xf32, #tpu.memory_space<vmem>>, %arg15: memref<1x32xf32, #tpu.memory_space<vmem>>, %arg16: memref<1x32xf32, #tpu.memory_space<vmem>>, %arg17: memref<2x8x32xf32, #tpu.memory_space<vmem>>) attributes {dimension_semantics = [#tpu.dimension_semantics<parallel>], iteration_bounds = array<i64: 1>, scalar_prefetch = 0 : i64, scratch_operands = 0 : i64, tpu.core_type = #tpu.core_type<tc>, window_params = [{transform_indices = @transform_0, window_bounds = array<i64: 2, 8, 32>}, {transform_indices = @transform_1, window_bounds = array<i64: 2, 8, 32>}, {pipeline_mode = #tpu.pipeline_mode<synchronous>, transform_indices = @transform_2, window_bounds = array<i64: 32, 32>}, {pipeline_mode = #tpu.pipeline_mode<synchronous>, transform_indices = @transform_3, window_bounds = array<i64: 1, 32>}, {pipeline_mode = #tpu.pipeline_mode<synchronous>, transform_indices = @transform_4, window_bounds = array<i64: 32, 64>}, {pipeline_mode = #tpu.pipeline_mode<synchronous>, transform_indices = @transform_5, window_bounds = array<i64: 1, 64>}, {pipeline_mode = #tpu.pipeline_mode<synchronous>, transform_indices = @transform_6, window_bounds = array<i64: 4, 8, 32>}, {pipeline_mode = #tpu.pipeline_mode<synchronous>, transform_indices = @transform_7, window_bounds = array<i64: 1, 32>}, {pipeline_mode = #tpu.pipeline_mode<synchronous>, transform_indices = @transform_8, window_bounds = array<i64: 1, 32>}, {pipeline_mode = #tpu.pipeline_mode<synchronous>, transform_indices = @transform_9, window_bounds = array<i64: 1, 32>}, {pipeline_mode = #tpu.pipeline_mode<synchronous>, transform_indices = @transform_10, window_bounds = array<i64: 32, 128>}, {pipeline_mode = #tpu.pipeline_mode<synchronous>, transform_indices = @transform_11, window_bounds = array<i64: 1, 128>}, {pipeline_mode = #tpu.pipeline_mode<synchronous>, transform_indices = @transform_12, window_bounds = array<i64: 128, 32>}, {pipeline_mode = #tpu.pipeline_mode<synchronous>, transform_indices = @transform_13, window_bounds = array<i64: 1, 32>}, {pipeline_mode = #tpu.pipeline_mode<synchronous>, transform_indices = @transform_14, window_bounds = array<i64: 1, 32>}, {pipeline_mode = #tpu.pipeline_mode<synchronous>, transform_indices = @transform_15, window_bounds = array<i64: 1, 32>}, {transform_indices = @transform_16, window_bounds = array<i64: 2, 8, 32>}]} {
    %c0 = arith.constant 0 : index
    %c0_0 = arith.constant 0 : index
    %c0_1 = arith.constant 0 : index
    %0 = vector.load %arg1[%c0, %c0_0, %c0_1] : memref<2x8x32xf32, #tpu.memory_space<vmem>>, vector<2x8x32xf32>
    %1 = vector.shape_cast %0 : vector<2x8x32xf32> to vector<16x32xf32>
    %c0_2 = arith.constant 0 : index
    %c0_3 = arith.constant 0 : index
    %c0_4 = arith.constant 0 : index
    %2 = vector.load %arg2[%c0_2, %c0_3, %c0_4] : memref<2x8x32xf32, #tpu.memory_space<vmem>>, vector<2x8x32xf32>
    %3 = vector.shape_cast %2 : vector<2x8x32xf32> to vector<16x32xf32>
    %4 = arith.truncf %1 : vector<16x32xf32> to vector<16x32xbf16>
    %c0_5 = arith.constant 0 : index
    %c0_6 = arith.constant 0 : index
    %5 = vector.load %arg3[%c0_5, %c0_6] : memref<32x32xbf16, #tpu.memory_space<vmem>>, vector<32x32xbf16>
    %cst = arith.constant dense<0.000000e+00> : vector<16x32xf32>
    %6 = tpu.matmul %4, %5, %cst {dimension_numbers = #tpu.dot_dimension_numbers<[1], [0], [0], [1], [0, 0, 1, 1], [], []>} : vector<16x32xbf16>, vector<32x32xbf16>, vector<16x32xf32> -> vector<16x32xf32>
    %c0_7 = arith.constant 0 : index
    %c0_8 = arith.constant 0 : index
    %7 = vector.load %arg4[%c0_7, %c0_8] : memref<1x32xf32, #tpu.memory_space<vmem>>, vector<1x32xf32>
    %8 = vector.broadcast %7 : vector<1x32xf32> to vector<16x32xf32>
    %9 = arith.addf %6, %8 : vector<16x32xf32>
    %10 = arith.truncf %3 : vector<16x32xf32> to vector<16x32xbf16>
    %c0_9 = arith.constant 0 : index
    %c0_10 = arith.constant 0 : index
    %11 = vector.load %arg5[%c0_9, %c0_10] : memref<32x64xbf16, #tpu.memory_space<vmem>>, vector<32x64xbf16>
    %cst_11 = arith.constant dense<0.000000e+00> : vector<16x64xf32>
    %12 = tpu.matmul %10, %11, %cst_11 {dimension_numbers = #tpu.dot_dimension_numbers<[1], [0], [0], [1], [0, 0, 1, 1], [], []>} : vector<16x32xbf16>, vector<32x64xbf16>, vector<16x64xf32> -> vector<16x64xf32>
    %c0_12 = arith.constant 0 : index
    %c0_13 = arith.constant 0 : index
    %13 = vector.load %arg6[%c0_12, %c0_13] : memref<1x64xf32, #tpu.memory_space<vmem>>, vector<1x64xf32>
    %14 = vector.broadcast %13 : vector<1x64xf32> to vector<16x64xf32>
    %15 = arith.addf %12, %14 : vector<16x64xf32>
    %16 = vector.shape_cast %9 : vector<16x32xf32> to vector<2x8x32xf32>
    %17 = vector.extract_strided_slice %15 {offsets = [0, 0], sizes = [16, 32], strides = [1, 1]} : vector<16x64xf32> to vector<16x32xf32>
    %18 = vector.shape_cast %17 : vector<16x32xf32> to vector<2x8x32xf32>
    %19 = vector.extract_strided_slice %15 {offsets = [0, 32], sizes = [16, 32], strides = [1, 1]} : vector<16x64xf32> to vector<16x32xf32>
    %20 = vector.shape_cast %19 : vector<16x32xf32> to vector<2x8x32xf32>
    %cst_14 = arith.constant 0.000000e+00 : f32
    %21 = vector.broadcast %cst_14 : f32 to vector<16x32xf32>
    %22 = vector.extract_strided_slice %16 {offsets = [0, 0, 0], sizes = [2, 8, 8], strides = [1, 1, 1]} : vector<2x8x32xf32> to vector<2x8x8xf32>
    %23 = arith.truncf %22 : vector<2x8x8xf32> to vector<2x8x8xbf16>
    %24 = vector.extract_strided_slice %18 {offsets = [0, 0, 0], sizes = [2, 8, 8], strides = [1, 1, 1]} : vector<2x8x32xf32> to vector<2x8x8xf32>
    %25 = arith.truncf %24 : vector<2x8x8xf32> to vector<2x8x8xbf16>
    %26 = vector.extract_strided_slice %20 {offsets = [0, 0, 0], sizes = [2, 8, 8], strides = [1, 1, 1]} : vector<2x8x32xf32> to vector<2x8x8xf32>
    %27 = arith.truncf %26 : vector<2x8x8xf32> to vector<2x8x8xbf16>
    "tpu.trace_start"() <{level = 10 : i32, message = "bqd,bkd->bqk"}> : () -> ()
    %cst_15 = arith.constant dense<0.000000e+00> : vector<2x8x8xf32>
    %28 = tpu.matmul %23, %25, %cst_15 {dimension_numbers = #tpu.dot_dimension_numbers<[2], [2], [1], [1], [0, 0, 0, 1, 1, 1], [0], [0]>} : vector<2x8x8xbf16>, vector<2x8x8xbf16>, vector<2x8x8xf32> -> vector<2x8x8xf32>
    "tpu.trace_stop"() : () -> ()
    %cst_16 = arith.constant dense<0xFF800000> : vector<2x8xf32>
    %29 = vector.multi_reduction <maximumf>, %28, %cst_16 [2] : vector<2x8x8xf32> to vector<2x8xf32>
    %30 = vector.shape_cast %29 : vector<2x8xf32> to vector<2x8x1xf32>
    %31 = vector.broadcast %30 : vector<2x8x1xf32> to vector<2x8x8xf32>
    %32 = arith.subf %28, %31 : vector<2x8x8xf32>
    %33 = math.exp %32 : vector<2x8x8xf32>
    %cst_17 = arith.constant dense<0.000000e+00> : vector<2x8xf32>
    %34 = vector.multi_reduction <add>, %33, %cst_17 [2] : vector<2x8x8xf32> to vector<2x8xf32>
    %35 = vector.shape_cast %34 : vector<2x8xf32> to vector<2x8x1xf32>
    %36 = tpu.reciprocal %35 {approx = true} : vector<2x8x1xf32> -> vector<2x8x1xf32>
    %37 = vector.broadcast %36 : vector<2x8x1xf32> to vector<2x8x8xf32>
    %38 = arith.mulf %33, %37 : vector<2x8x8xf32>
    %39 = arith.truncf %38 : vector<2x8x8xf32> to vector<2x8x8xbf16>
    "tpu.trace_start"() <{level = 10 : i32, message = "bqk,bkd->bqd"}> : () -> ()
    %cst_18 = arith.constant dense<0.000000e+00> : vector<2x8x8xf32>
    %40 = tpu.matmul %39, %27, %cst_18 {dimension_numbers = #tpu.dot_dimension_numbers<[2], [1], [1], [2], [0, 0, 0, 1, 1, 2], [0], [0]>} : vector<2x8x8xbf16>, vector<2x8x8xbf16>, vector<2x8x8xf32> -> vector<2x8x8xf32>
    "tpu.trace_stop"() : () -> ()
    %41 = vector.shape_cast %40 : vector<2x8x8xf32> to vector<16x8xf32>
    %42 = arith.truncf %41 : vector<16x8xf32> to vector<16x8xbf16>
    %c0_19 = arith.constant 0 : index
    %c0_20 = arith.constant 0 : index
    %c0_21 = arith.constant 0 : index
    %43 = vector.load %arg7[%c0_19, %c0_20, %c0_21] : memref<4x8x32xbf16, #tpu.memory_space<vmem>>, vector<1x8x32xbf16>
    %44 = vector.shape_cast %43 : vector<1x8x32xbf16> to vector<8x32xbf16>
    %cst_22 = arith.constant dense<0.000000e+00> : vector<16x32xf32>
    %45 = tpu.matmul %42, %44, %cst_22 {dimension_numbers = #tpu.dot_dimension_numbers<[1], [0], [0], [1], [0, 0, 1, 1], [], []>} : vector<16x8xbf16>, vector<8x32xbf16>, vector<16x32xf32> -> vector<16x32xf32>
    %46 = arith.addf %21, %45 : vector<16x32xf32>
    %47 = vector.extract_strided_slice %16 {offsets = [0, 0, 8], sizes = [2, 8, 8], strides = [1, 1, 1]} : vector<2x8x32xf32> to vector<2x8x8xf32>
    %48 = arith.truncf %47 : vector<2x8x8xf32> to vector<2x8x8xbf16>
    %49 = vector.extract_strided_slice %18 {offsets = [0, 0, 8], sizes = [2, 8, 8], strides = [1, 1, 1]} : vector<2x8x32xf32> to vector<2x8x8xf32>
    %50 = arith.truncf %49 : vector<2x8x8xf32> to vector<2x8x8xbf16>
    %51 = vector.extract_strided_slice %20 {offsets = [0, 0, 8], sizes = [2, 8, 8], strides = [1, 1, 1]} : vector<2x8x32xf32> to vector<2x8x8xf32>
    %52 = arith.truncf %51 : vector<2x8x8xf32> to vector<2x8x8xbf16>
    "tpu.trace_start"() <{level = 10 : i32, message = "bqd,bkd->bqk"}> : () -> ()
    %cst_23 = arith.constant dense<0.000000e+00> : vector<2x8x8xf32>
    %53 = tpu.matmul %48, %50, %cst_23 {dimension_numbers = #tpu.dot_dimension_numbers<[2], [2], [1], [1], [0, 0, 0, 1, 1, 1], [0], [0]>} : vector<2x8x8xbf16>, vector<2x8x8xbf16>, vector<2x8x8xf32> -> vector<2x8x8xf32>
    "tpu.trace_stop"() : () -> ()
    %cst_24 = arith.constant dense<0xFF800000> : vector<2x8xf32>
    %54 = vector.multi_reduction <maximumf>, %53, %cst_24 [2] : vector<2x8x8xf32> to vector<2x8xf32>
    %55 = vector.shape_cast %54 : vector<2x8xf32> to vector<2x8x1xf32>
    %56 = vector.broadcast %55 : vector<2x8x1xf32> to vector<2x8x8xf32>
    %57 = arith.subf %53, %56 : vector<2x8x8xf32>
    %58 = math.exp %57 : vector<2x8x8xf32>
    %cst_25 = arith.constant dense<0.000000e+00> : vector<2x8xf32>
    %59 = vector.multi_reduction <add>, %58, %cst_25 [2] : vector<2x8x8xf32> to vector<2x8xf32>
    %60 = vector.shape_cast %59 : vector<2x8xf32> to vector<2x8x1xf32>
    %61 = tpu.reciprocal %60 {approx = true} : vector<2x8x1xf32> -> vector<2x8x1xf32>
    %62 = vector.broadcast %61 : vector<2x8x1xf32> to vector<2x8x8xf32>
    %63 = arith.mulf %58, %62 : vector<2x8x8xf32>
    %64 = arith.truncf %63 : vector<2x8x8xf32> to vector<2x8x8xbf16>
    "tpu.trace_start"() <{level = 10 : i32, message = "bqk,bkd->bqd"}> : () -> ()
    %cst_26 = arith.constant dense<0.000000e+00> : vector<2x8x8xf32>
    %65 = tpu.matmul %64, %52, %cst_26 {dimension_numbers = #tpu.dot_dimension_numbers<[2], [1], [1], [2], [0, 0, 0, 1, 1, 2], [0], [0]>} : vector<2x8x8xbf16>, vector<2x8x8xbf16>, vector<2x8x8xf32> -> vector<2x8x8xf32>
    "tpu.trace_stop"() : () -> ()
    %66 = vector.shape_cast %65 : vector<2x8x8xf32> to vector<16x8xf32>
    %67 = arith.truncf %66 : vector<16x8xf32> to vector<16x8xbf16>
    %c1 = arith.constant 1 : index
    %c0_27 = arith.constant 0 : index
    %c0_28 = arith.constant 0 : index
    %68 = vector.load %arg7[%c1, %c0_27, %c0_28] : memref<4x8x32xbf16, #tpu.memory_space<vmem>>, vector<1x8x32xbf16>
    %69 = vector.shape_cast %68 : vector<1x8x32xbf16> to vector<8x32xbf16>
    %cst_29 = arith.constant dense<0.000000e+00> : vector<16x32xf32>
    %70 = tpu.matmul %67, %69, %cst_29 {dimension_numbers = #tpu.dot_dimension_numbers<[1], [0], [0], [1], [0, 0, 1, 1], [], []>} : vector<16x8xbf16>, vector<8x32xbf16>, vector<16x32xf32> -> vector<16x32xf32>
    %71 = arith.addf %46, %70 : vector<16x32xf32>
    %72 = vector.extract_strided_slice %16 {offsets = [0, 0, 16], sizes = [2, 8, 8], strides = [1, 1, 1]} : vector<2x8x32xf32> to vector<2x8x8xf32>
    %73 = arith.truncf %72 : vector<2x8x8xf32> to vector<2x8x8xbf16>
    %74 = vector.extract_strided_slice %18 {offsets = [0, 0, 16], sizes = [2, 8, 8], strides = [1, 1, 1]} : vector<2x8x32xf32> to vector<2x8x8xf32>
    %75 = arith.truncf %74 : vector<2x8x8xf32> to vector<2x8x8xbf16>
    %76 = vector.extract_strided_slice %20 {offsets = [0, 0, 16], sizes = [2, 8, 8], strides = [1, 1, 1]} : vector<2x8x32xf32> to vector<2x8x8xf32>
    %77 = arith.truncf %76 : vector<2x8x8xf32> to vector<2x8x8xbf16>
    "tpu.trace_start"() <{level = 10 : i32, message = "bqd,bkd->bqk"}> : () -> ()
    %cst_30 = arith.constant dense<0.000000e+00> : vector<2x8x8xf32>
    %78 = tpu.matmul %73, %75, %cst_30 {dimension_numbers = #tpu.dot_dimension_numbers<[2], [2], [1], [1], [0, 0, 0, 1, 1, 1], [0], [0]>} : vector<2x8x8xbf16>, vector<2x8x8xbf16>, vector<2x8x8xf32> -> vector<2x8x8xf32>
    "tpu.trace_stop"() : () -> ()
    %cst_31 = arith.constant dense<0xFF800000> : vector<2x8xf32>
    %79 = vector.multi_reduction <maximumf>, %78, %cst_31 [2] : vector<2x8x8xf32> to vector<2x8xf32>
    %80 = vector.shape_cast %79 : vector<2x8xf32> to vector<2x8x1xf32>
    %81 = vector.broadcast %80 : vector<2x8x1xf32> to vector<2x8x8xf32>
    %82 = arith.subf %78, %81 : vector<2x8x8xf32>
    %83 = math.exp %82 : vector<2x8x8xf32>
    %cst_32 = arith.constant dense<0.000000e+00> : vector<2x8xf32>
    %84 = vector.multi_reduction <add>, %83, %cst_32 [2] : vector<2x8x8xf32> to vector<2x8xf32>
    %85 = vector.shape_cast %84 : vector<2x8xf32> to vector<2x8x1xf32>
    %86 = tpu.reciprocal %85 {approx = true} : vector<2x8x1xf32> -> vector<2x8x1xf32>
    %87 = vector.broadcast %86 : vector<2x8x1xf32> to vector<2x8x8xf32>
    %88 = arith.mulf %83, %87 : vector<2x8x8xf32>
    %89 = arith.truncf %88 : vector<2x8x8xf32> to vector<2x8x8xbf16>
    "tpu.trace_start"() <{level = 10 : i32, message = "bqk,bkd->bqd"}> : () -> ()
    %cst_33 = arith.constant dense<0.000000e+00> : vector<2x8x8xf32>
    %90 = tpu.matmul %89, %77, %cst_33 {dimension_numbers = #tpu.dot_dimension_numbers<[2], [1], [1], [2], [0, 0, 0, 1, 1, 2], [0], [0]>} : vector<2x8x8xbf16>, vector<2x8x8xbf16>, vector<2x8x8xf32> -> vector<2x8x8xf32>
    "tpu.trace_stop"() : () -> ()
    %91 = vector.shape_cast %90 : vector<2x8x8xf32> to vector<16x8xf32>
    %92 = arith.truncf %91 : vector<16x8xf32> to vector<16x8xbf16>
    %c2 = arith.constant 2 : index
    %c0_34 = arith.constant 0 : index
    %c0_35 = arith.constant 0 : index
    %93 = vector.load %arg7[%c2, %c0_34, %c0_35] : memref<4x8x32xbf16, #tpu.memory_space<vmem>>, vector<1x8x32xbf16>
    %94 = vector.shape_cast %93 : vector<1x8x32xbf16> to vector<8x32xbf16>
    %cst_36 = arith.constant dense<0.000000e+00> : vector<16x32xf32>
    %95 = tpu.matmul %92, %94, %cst_36 {dimension_numbers = #tpu.dot_dimension_numbers<[1], [0], [0], [1], [0, 0, 1, 1], [], []>} : vector<16x8xbf16>, vector<8x32xbf16>, vector<16x32xf32> -> vector<16x32xf32>
    %96 = arith.addf %71, %95 : vector<16x32xf32>
    %97 = vector.extract_strided_slice %16 {offsets = [0, 0, 24], sizes = [2, 8, 8], strides = [1, 1, 1]} : vector<2x8x32xf32> to vector<2x8x8xf32>
    %98 = arith.truncf %97 : vector<2x8x8xf32> to vector<2x8x8xbf16>
    %99 = vector.extract_strided_slice %18 {offsets = [0, 0, 24], sizes = [2, 8, 8], strides = [1, 1, 1]} : vector<2x8x32xf32> to vector<2x8x8xf32>
    %100 = arith.truncf %99 : vector<2x8x8xf32> to vector<2x8x8xbf16>
    %101 = vector.extract_strided_slice %20 {offsets = [0, 0, 24], sizes = [2, 8, 8], strides = [1, 1, 1]} : vector<2x8x32xf32> to vector<2x8x8xf32>
    %102 = arith.truncf %101 : vector<2x8x8xf32> to vector<2x8x8xbf16>
    "tpu.trace_start"() <{level = 10 : i32, message = "bqd,bkd->bqk"}> : () -> ()
    %cst_37 = arith.constant dense<0.000000e+00> : vector<2x8x8xf32>
    %103 = tpu.matmul %98, %100, %cst_37 {dimension_numbers = #tpu.dot_dimension_numbers<[2], [2], [1], [1], [0, 0, 0, 1, 1, 1], [0], [0]>} : vector<2x8x8xbf16>, vector<2x8x8xbf16>, vector<2x8x8xf32> -> vector<2x8x8xf32>
    "tpu.trace_stop"() : () -> ()
    %cst_38 = arith.constant dense<0xFF800000> : vector<2x8xf32>
    %104 = vector.multi_reduction <maximumf>, %103, %cst_38 [2] : vector<2x8x8xf32> to vector<2x8xf32>
    %105 = vector.shape_cast %104 : vector<2x8xf32> to vector<2x8x1xf32>
    %106 = vector.broadcast %105 : vector<2x8x1xf32> to vector<2x8x8xf32>
    %107 = arith.subf %103, %106 : vector<2x8x8xf32>
    %108 = math.exp %107 : vector<2x8x8xf32>
    %cst_39 = arith.constant dense<0.000000e+00> : vector<2x8xf32>
    %109 = vector.multi_reduction <add>, %108, %cst_39 [2] : vector<2x8x8xf32> to vector<2x8xf32>
    %110 = vector.shape_cast %109 : vector<2x8xf32> to vector<2x8x1xf32>
    %111 = tpu.reciprocal %110 {approx = true} : vector<2x8x1xf32> -> vector<2x8x1xf32>
    %112 = vector.broadcast %111 : vector<2x8x1xf32> to vector<2x8x8xf32>
    %113 = arith.mulf %108, %112 : vector<2x8x8xf32>
    %114 = arith.truncf %113 : vector<2x8x8xf32> to vector<2x8x8xbf16>
    "tpu.trace_start"() <{level = 10 : i32, message = "bqk,bkd->bqd"}> : () -> ()
    %cst_40 = arith.constant dense<0.000000e+00> : vector<2x8x8xf32>
    %115 = tpu.matmul %114, %102, %cst_40 {dimension_numbers = #tpu.dot_dimension_numbers<[2], [1], [1], [2], [0, 0, 0, 1, 1, 2], [0], [0]>} : vector<2x8x8xbf16>, vector<2x8x8xbf16>, vector<2x8x8xf32> -> vector<2x8x8xf32>
    "tpu.trace_stop"() : () -> ()
    %116 = vector.shape_cast %115 : vector<2x8x8xf32> to vector<16x8xf32>
    %117 = arith.truncf %116 : vector<16x8xf32> to vector<16x8xbf16>
    %c3 = arith.constant 3 : index
    %c0_41 = arith.constant 0 : index
    %c0_42 = arith.constant 0 : index
    %118 = vector.load %arg7[%c3, %c0_41, %c0_42] : memref<4x8x32xbf16, #tpu.memory_space<vmem>>, vector<1x8x32xbf16>
    %119 = vector.shape_cast %118 : vector<1x8x32xbf16> to vector<8x32xbf16>
    %cst_43 = arith.constant dense<0.000000e+00> : vector<16x32xf32>
    %120 = tpu.matmul %117, %119, %cst_43 {dimension_numbers = #tpu.dot_dimension_numbers<[1], [0], [0], [1], [0, 0, 1, 1], [], []>} : vector<16x8xbf16>, vector<8x32xbf16>, vector<16x32xf32> -> vector<16x32xf32>
    %121 = arith.addf %96, %120 : vector<16x32xf32>
    %c0_44 = arith.constant 0 : index
    %c0_45 = arith.constant 0 : index
    %122 = vector.load %arg8[%c0_44, %c0_45] : memref<1x32xf32, #tpu.memory_space<vmem>>, vector<1x32xf32>
    %123 = vector.broadcast %122 : vector<1x32xf32> to vector<16x32xf32>
    %124 = arith.addf %121, %123 : vector<16x32xf32>
    %125 = arith.addf %1, %124 : vector<16x32xf32>
    %c0_46 = arith.constant 0 : index
    %c0_47 = arith.constant 0 : index
    %126 = vector.load %arg9[%c0_46, %c0_47] : memref<1x32xf32, #tpu.memory_space<vmem>>, vector<1x32xf32>
    %c0_48 = arith.constant 0 : index
    %c0_49 = arith.constant 0 : index
    %127 = vector.load %arg10[%c0_48, %c0_49] : memref<1x32xf32, #tpu.memory_space<vmem>>, vector<1x32xf32>
    %cst_50 = arith.constant dense<0.000000e+00> : vector<16xf32>
    %128 = vector.multi_reduction <add>, %125, %cst_50 [1] : vector<16x32xf32> to vector<16xf32>
    %129 = vector.shape_cast %128 : vector<16xf32> to vector<16x1xf32>
    %cst_51 = arith.constant 3.200000e+01 : f32
    %130 = vector.broadcast %cst_51 : f32 to vector<16x1xf32>
    %131 = arith.divf %129, %130 : vector<16x1xf32>
    %132 = vector.broadcast %131 : vector<16x1xf32> to vector<16x32xf32>
    %133 = arith.subf %125, %132 : vector<16x32xf32>
    %134 = arith.mulf %133, %133 : vector<16x32xf32>
    %cst_52 = arith.constant dense<0.000000e+00> : vector<16xf32>
    %135 = vector.multi_reduction <add>, %134, %cst_52 [1] : vector<16x32xf32> to vector<16xf32>
    %136 = vector.shape_cast %135 : vector<16xf32> to vector<16x1xf32>
    %cst_53 = arith.constant 3.200000e+01 : f32
    %137 = vector.broadcast %cst_53 : f32 to vector<16x1xf32>
    %138 = arith.divf %136, %137 : vector<16x1xf32>
    %cst_54 = arith.constant 9.99999974E-6 : f32
    %139 = vector.broadcast %cst_54 : f32 to vector<16x1xf32>
    %140 = arith.addf %138, %139 : vector<16x1xf32>
    %141 = math.rsqrt %140 : vector<16x1xf32>
    %142 = vector.broadcast %141 : vector<16x1xf32> to vector<16x32xf32>
    %143 = arith.mulf %133, %142 : vector<16x32xf32>
    %144 = vector.broadcast %126 : vector<1x32xf32> to vector<16x32xf32>
    %145 = arith.mulf %143, %144 : vector<16x32xf32>
    %146 = vector.broadcast %127 : vector<1x32xf32> to vector<16x32xf32>
    %147 = arith.addf %145, %146 : vector<16x32xf32>
    %148 = arith.truncf %147 : vector<16x32xf32> to vector<16x32xbf16>
    %c0_55 = arith.constant 0 : index
    %c0_56 = arith.constant 0 : index
    %149 = vector.load %arg11[%c0_55, %c0_56] : memref<32x128xbf16, #tpu.memory_space<vmem>>, vector<32x128xbf16>
    %cst_57 = arith.constant dense<0.000000e+00> : vector<16x128xf32>
    %150 = tpu.matmul %148, %149, %cst_57 {dimension_numbers = #tpu.dot_dimension_numbers<[1], [0], [0], [1], [0, 0, 1, 1], [], []>} : vector<16x32xbf16>, vector<32x128xbf16>, vector<16x128xf32> -> vector<16x128xf32>
    %c0_58 = arith.constant 0 : index
    %c0_59 = arith.constant 0 : index
    %151 = vector.load %arg12[%c0_58, %c0_59] : memref<1x128xf32, #tpu.memory_space<vmem>>, vector<1x128xf32>
    %152 = vector.broadcast %151 : vector<1x128xf32> to vector<16x128xf32>
    %153 = arith.addf %150, %152 : vector<16x128xf32>
    %cst_60 = arith.constant 0.000000e+00 : f32
    %154 = vector.broadcast %cst_60 : f32 to vector<16x128xf32>
    %155 = arith.maximumf %153, %154 : vector<16x128xf32>
    %156 = arith.truncf %155 : vector<16x128xf32> to vector<16x128xbf16>
    %c0_61 = arith.constant 0 : index
    %c0_62 = arith.constant 0 : index
    %157 = vector.load %arg13[%c0_61, %c0_62] : memref<128x32xbf16, #tpu.memory_space<vmem>>, vector<128x32xbf16>
    %cst_63 = arith.constant dense<0.000000e+00> : vector<16x32xf32>
    %158 = tpu.matmul %156, %157, %cst_63 {dimension_numbers = #tpu.dot_dimension_numbers<[1], [0], [0], [1], [0, 0, 1, 1], [], []>} : vector<16x128xbf16>, vector<128x32xbf16>, vector<16x32xf32> -> vector<16x32xf32>
    %c0_64 = arith.constant 0 : index
    %c0_65 = arith.constant 0 : index
    %159 = vector.load %arg14[%c0_64, %c0_65] : memref<1x32xf32, #tpu.memory_space<vmem>>, vector<1x32xf32>
    %160 = vector.broadcast %159 : vector<1x32xf32> to vector<16x32xf32>
    %161 = arith.addf %158, %160 : vector<16x32xf32>
    %162 = arith.addf %147, %161 : vector<16x32xf32>
    %c0_66 = arith.constant 0 : index
    %c0_67 = arith.constant 0 : index
    %163 = vector.load %arg15[%c0_66, %c0_67] : memref<1x32xf32, #tpu.memory_space<vmem>>, vector<1x32xf32>
    %c0_68 = arith.constant 0 : index
    %c0_69 = arith.constant 0 : index
    %164 = vector.load %arg16[%c0_68, %c0_69] : memref<1x32xf32, #tpu.memory_space<vmem>>, vector<1x32xf32>
    %cst_70 = arith.constant dense<0.000000e+00> : vector<16xf32>
    %165 = vector.multi_reduction <add>, %162, %cst_70 [1] : vector<16x32xf32> to vector<16xf32>
    %166 = vector.shape_cast %165 : vector<16xf32> to vector<16x1xf32>
    %cst_71 = arith.constant 3.200000e+01 : f32
    %167 = vector.broadcast %cst_71 : f32 to vector<16x1xf32>
    %168 = arith.divf %166, %167 : vector<16x1xf32>
    %169 = vector.broadcast %168 : vector<16x1xf32> to vector<16x32xf32>
    %170 = arith.subf %162, %169 : vector<16x32xf32>
    %171 = arith.mulf %170, %170 : vector<16x32xf32>
    %cst_72 = arith.constant dense<0.000000e+00> : vector<16xf32>
    %172 = vector.multi_reduction <add>, %171, %cst_72 [1] : vector<16x32xf32> to vector<16xf32>
    %173 = vector.shape_cast %172 : vector<16xf32> to vector<16x1xf32>
    %cst_73 = arith.constant 3.200000e+01 : f32
    %174 = vector.broadcast %cst_73 : f32 to vector<16x1xf32>
    %175 = arith.divf %173, %174 : vector<16x1xf32>
    %cst_74 = arith.constant 9.99999974E-6 : f32
    %176 = vector.broadcast %cst_74 : f32 to vector<16x1xf32>
    %177 = arith.addf %175, %176 : vector<16x1xf32>
    %178 = math.rsqrt %177 : vector<16x1xf32>
    %179 = vector.broadcast %178 : vector<16x1xf32> to vector<16x32xf32>
    %180 = arith.mulf %170, %179 : vector<16x32xf32>
    %181 = vector.broadcast %163 : vector<1x32xf32> to vector<16x32xf32>
    %182 = arith.mulf %180, %181 : vector<16x32xf32>
    %183 = vector.broadcast %164 : vector<1x32xf32> to vector<16x32xf32>
    %184 = arith.addf %182, %183 : vector<16x32xf32>
    %185 = vector.shape_cast %184 : vector<16x32xf32> to vector<2x8x32xf32>
    %c0_75 = arith.constant 0 : index
    %c0_76 = arith.constant 0 : index
    %c0_77 = arith.constant 0 : index
    %186 = vector.load %arg17[%c0_75, %c0_76, %c0_77] : memref<2x8x32xf32, #tpu.memory_space<vmem>>, vector<2x8x32xf32>
    tpu.vector_store %arg17[%c0_75, %c0_76, %c0_77], %185 {strides = array<i32>} : memref<2x8x32xf32, #tpu.memory_space<vmem>>, vector<2x8x32xf32>,
    return
  }
  func.func @transform_0(%arg0: i32) -> (i32, i32, i32) {
    %c0_i32 = arith.constant 0 : i32
    %c0_i32_0 = arith.constant 0 : i32
    %c0_i32_1 = arith.constant 0 : i32
    return %arg0, %c0_i32, %c0_i32_0 : i32, i32, i32
  }
  func.func @transform_1(%arg0: i32) -> (i32, i32, i32) {
    %c0_i32 = arith.constant 0 : i32
    %c0_i32_0 = arith.constant 0 : i32
    %c0_i32_1 = arith.constant 0 : i32
    return %arg0, %c0_i32, %c0_i32_0 : i32, i32, i32
  }
  func.func @transform_2(%arg0: i32) -> (i32, i32) {
    %c0_i32 = arith.constant 0 : i32
    %c0_i32_0 = arith.constant 0 : i32
    %c0_i32_1 = arith.constant 0 : i32
    return %c0_i32, %c0_i32_0 : i32, i32
  }
  func.func @transform_3(%arg0: i32) -> (i32, i32) {
    %c0_i32 = arith.constant 0 : i32
    %c0_i32_0 = arith.constant 0 : i32
    %c0_i32_1 = arith.constant 0 : i32
    return %c0_i32, %c0_i32_0 : i32, i32
  }
  func.func @transform_4(%arg0: i32) -> (i32, i32) {
    %c0_i32 = arith.constant 0 : i32
    %c0_i32_0 = arith.constant 0 : i32
    %c0_i32_1 = arith.constant 0 : i32
    return %c0_i32, %c0_i32_0 : i32, i32
  }
  func.func @transform_5(%arg0: i32) -> (i32, i32) {
    %c0_i32 = arith.constant 0 : i32
    %c0_i32_0 = arith.constant 0 : i32
    %c0_i32_1 = arith.constant 0 : i32
    return %c0_i32, %c0_i32_0 : i32, i32
  }
  func.func @transform_6(%arg0: i32) -> (i32, i32, i32) {
    %c0_i32 = arith.constant 0 : i32
    %c0_i32_0 = arith.constant 0 : i32
    %c0_i32_1 = arith.constant 0 : i32
    %c0_i32_2 = arith.constant 0 : i32
    return %c0_i32, %c0_i32_0, %c0_i32_1 : i32, i32, i32
  }
  func.func @transform_7(%arg0: i32) -> (i32, i32) {
    %c0_i32 = arith.constant 0 : i32
    %c0_i32_0 = arith.constant 0 : i32
    %c0_i32_1 = arith.constant 0 : i32
    return %c0_i32, %c0_i32_0 : i32, i32
  }
  func.func @transform_8(%arg0: i32) -> (i32, i32) {
    %c0_i32 = arith.constant 0 : i32
    %c0_i32_0 = arith.constant 0 : i32
    %c0_i32_1 = arith.constant 0 : i32
    return %c0_i32, %c0_i32_0 : i32, i32
  }
  func.func @transform_9(%arg0: i32) -> (i32, i32) {
    %c0_i32 = arith.constant 0 : i32
    %c0_i32_0 = arith.constant 0 : i32
    %c0_i32_1 = arith.constant 0 : i32
    return %c0_i32, %c0_i32_0 : i32, i32
  }
  func.func @transform_10(%arg0: i32) -> (i32, i32) {
    %c0_i32 = arith.constant 0 : i32
    %c0_i32_0 = arith.constant 0 : i32
    %c0_i32_1 = arith.constant 0 : i32
    return %c0_i32, %c0_i32_0 : i32, i32
  }
  func.func @transform_11(%arg0: i32) -> (i32, i32) {
    %c0_i32 = arith.constant 0 : i32
    %c0_i32_0 = arith.constant 0 : i32
    %c0_i32_1 = arith.constant 0 : i32
    return %c0_i32, %c0_i32_0 : i32, i32
  }
  func.func @transform_12(%arg0: i32) -> (i32, i32) {
    %c0_i32 = arith.constant 0 : i32
    %c0_i32_0 = arith.constant 0 : i32
    %c0_i32_1 = arith.constant 0 : i32
    return %c0_i32, %c0_i32_0 : i32, i32
  }
  func.func @transform_13(%arg0: i32) -> (i32, i32) {
    %c0_i32 = arith.constant 0 : i32
    %c0_i32_0 = arith.constant 0 : i32
    %c0_i32_1 = arith.constant 0 : i32
    return %c0_i32, %c0_i32_0 : i32, i32
  }
  func.func @transform_14(%arg0: i32) -> (i32, i32) {
    %c0_i32 = arith.constant 0 : i32
    %c0_i32_0 = arith.constant 0 : i32
    %c0_i32_1 = arith.constant 0 : i32
    return %c0_i32, %c0_i32_0 : i32, i32
  }
  func.func @transform_15(%arg0: i32) -> (i32, i32) {
    %c0_i32 = arith.constant 0 : i32
    %c0_i32_0 = arith.constant 0 : i32
    %c0_i32_1 = arith.constant 0 : i32
    return %c0_i32, %c0_i32_0 : i32, i32
  }
  func.func @transform_16(%arg0: i32) -> (i32, i32, i32) {
    %c0_i32 = arith.constant 0 : i32
    %c0_i32_0 = arith.constant 0 : i32
    %c0_i32_1 = arith.constant 0 : i32
    return %arg0, %c0_i32, %c0_i32_0 : i32, i32, i32
  }
}

</mosaic_0001>

<llo_original>
// kernel: tpu_custom_call.1
$region0: #{tpu_custom_call.1}
  #allocation0 [shape = 'u32[]', space=smem, size = 0x4, offset = 0x4, fixed_abs, tag = 'smem constant byte address 0x4 - core index']
  #allocation1 [shape = 'u32[144,128]{1,0:T(1,128)}', space=vmem, size = 0x12000, scoped, tag = 'internal scratch']
  %s0 = inlined_call_operand.vmem [shape: f32[2,8,32], index: 0, kind: input, shape index: {}]
  %s1 = inlined_call_operand.vmem [shape: f32[2,8,32], index: 1, kind: input, shape index: {}]
  %s2 = inlined_call_operand.vmem [shape: bf16[32,32], index: 2, kind: input, shape index: {}]
  %s3 = inlined_call_operand.vmem [shape: f32[1,32], index: 3, kind: input, shape index: {}]
  %s4 = inlined_call_operand.vmem [shape: bf16[32,64], index: 4, kind: input, shape index: {}]
  %s5 = inlined_call_operand.vmem [shape: f32[1,64], index: 5, kind: input, shape index: {}]
  %s6 = inlined_call_operand.vmem [shape: bf16[4,8,32], index: 6, kind: input, shape index: {}]
  %s7 = inlined_call_operand.hbm [shape: f32[1,32], index: 7, kind: input, shape index: {}]
  %s8 = inlined_call_operand.hbm [shape: f32[1,32], index: 8, kind: input, shape index: {}]
  %s9 = inlined_call_operand.hbm [shape: f32[1,32], index: 9, kind: input, shape index: {}]
  %s10 = inlined_call_operand.vmem [shape: bf16[32,128], index: 10, kind: input, shape index: {}]
  %s11 = inlined_call_operand.vmem [shape: f32[1,128], index: 11, kind: input, shape index: {}]
  %s12 = inlined_call_operand.vmem [shape: bf16[128,32], index: 12, kind: input, shape index: {}]
  %s13 = inlined_call_operand.vmem [shape: f32[1,32], index: 13, kind: input, shape index: {}]
  %s14 = inlined_call_operand.vmem [shape: f32[1,32], index: 14, kind: input, shape index: {}]
  %s15 = inlined_call_operand.vmem [shape: f32[1,32], index: 15, kind: input, shape index: {}]
  %s16 = inlined_call_operand.hbm [shape: f32[2,8,32], index: 16, kind: output, shape index: {}]
  %s17 = sld [smem:[#allocation0]]
  $region86: #{tpu_custom_call.1} parent=0
    _
  %s19 = ssub.s32 1, %s17
  %s20 = scalar_select 0, %s19, %s17
  $region1: #{tpu_custom_call.1} parent=0
    #allocation2 [shape = 'u8[512]{0}', space=vmem, size = 0x400, scoped, tag = 'input window, operand 7, single buffered']
    #allocation3 [shape = 's32[1]{0}', space=sflag, size = 0x4, scoped, tag = 'scoped memory for tpu_custom_call.1']
    #allocation4 [shape = 's32[1]{0}', space=sflag, size = 0x4, scoped, tag = 'scoped memory for tpu_custom_call.1']
    #allocation5 [shape = 'u8[512]{0}', space=vmem, size = 0x400, scoped, tag = 'input window, operand 8, single buffered']
    #allocation6 [shape = 's32[1]{0}', space=sflag, size = 0x4, scoped, tag = 'scoped memory for tpu_custom_call.1']
    #allocation7 [shape = 'u8[512]{0}', space=vmem, size = 0x400, scoped, tag = 'input window, operand 9, single buffered']
    #allocation8 [shape = 'u8[8192]{0}', space=vmem, size = 0x2000, scoped, tag = 'output window, operand 0, single buffered']
    %21 = vsyncpa [#allocation3], 0
    %22 = vsyncpa [#allocation6], 0
    %23 = vsyncpa [#allocation4], 0
    // Predicated region
    $region2: #{tpu_custom_call.1} parent=1 // pred_check
      _
    $region3: #{tpu_custom_call.1} parent=1 // pred_check_branch
      %25 = sbr.rel (0) target = $region5
    $region4: #{tpu_custom_call.1} parent=1 // pred_region
      _
    $region5: #{tpu_custom_call.1} parent=1 // pred_fallthru
      _
    // Predicated region
    $region6: #{tpu_custom_call.1} parent=1 // pred_check
      _
    $region7: #{tpu_custom_call.1} parent=1 // pred_check_branch
      %27 = sbr.rel (0) target = $region9
    $region8: #{tpu_custom_call.1} parent=1 // pred_region
      _
    $region9: #{tpu_custom_call.1} parent=1 // pred_fallthru
      _
    // Predicated region
    $region10: #{tpu_custom_call.1} parent=1 // pred_check
      _
    $region11: #{tpu_custom_call.1} parent=1 // pred_check_branch
      %29 = sbr.rel (0) target = $region13
    $region12: #{tpu_custom_call.1} parent=1 // pred_region
      _
    $region13: #{tpu_custom_call.1} parent=1 // pred_fallthru
      _
    // Predicated region
    $region14: #{tpu_custom_call.1} parent=1 // pred_check
      _
    $region15: #{tpu_custom_call.1} parent=1 // pred_check_branch
      %31 = sbr.rel (0) target = $region17
    $region16: #{tpu_custom_call.1} parent=1 // pred_region
      _
    $region17: #{tpu_custom_call.1} parent=1 // pred_fallthru
      _
    // Predicated region
    $region18: #{tpu_custom_call.1} parent=1 // pred_check
      _
    $region19: #{tpu_custom_call.1} parent=1 // pred_check_branch
      %33 = sbr.rel (0) target = $region21
    $region20: #{tpu_custom_call.1} parent=1 // pred_region
      _
    $region21: #{tpu_custom_call.1} parent=1 // pred_fallthru
      _
    // Predicated region
    $region22: #{tpu_custom_call.1} parent=1 // pred_check
      _
    $region23: #{tpu_custom_call.1} parent=1 // pred_check_branch
      %35 = sbr.rel (0) target = $region25
    $region24: #{tpu_custom_call.1} parent=1 // pred_region
      _
    $region25: #{tpu_custom_call.1} parent=1 // pred_fallthru
      _
    // Predicated region
    $region26: #{tpu_custom_call.1} parent=1 // pred_check
      _
    $region27: #{tpu_custom_call.1} parent=1 // pred_check_branch
      %37 = sbr.rel (0) target = $region29
    $region28: #{tpu_custom_call.1} parent=1 // pred_region
      _
    $region29: #{tpu_custom_call.1} parent=1 // pred_fallthru
      _
    // Predicated region
    $region30: #{tpu_custom_call.1} parent=1 // pred_check
      _
    $region31: #{tpu_custom_call.1} parent=1 // pred_check_branch
      %39 = sbr.rel (0) target = $region33
    $region32: #{tpu_custom_call.1} parent=1 // pred_region
      %s41 = ssub.s32 16, 16
      %42 = vsyncadd [#allocation3], %s41
      %s44 = sshll.u32 [#allocation2], 4
      %s45 = int_to_ptr.vmem [resolvable:$true] %s44
      %47 = dma.hbm_to_vmem [thread:$0]  %s7, 16, %s45, [#allocation3]
    $region33: #{tpu_custom_call.1} parent=1 // pred_fallthru
      _
    // Predicated region
    $region34: #{tpu_custom_call.1} parent=1 // pred_check
      _
    $region35: #{tpu_custom_call.1} parent=1 // pred_check_branch
      %49 = sbr.rel (0) target = $region37
    $region36: #{tpu_custom_call.1} parent=1 // pred_region
      %s51 = ssub.s32 16, 16
      %52 = vsyncadd [#allocation6], %s51
      %s54 = sshll.u32 [#allocation5], 4
      %s55 = int_to_ptr.vmem [resolvable:$true] %s54
      %57 = dma.hbm_to_vmem [thread:$0]  %s8, 16, %s55, [#allocation6]
    $region37: #{tpu_custom_call.1} parent=1 // pred_fallthru
      _
    // Predicated region
    $region38: #{tpu_custom_call.1} parent=1 // pred_check
      _
    $region39: #{tpu_custom_call.1} parent=1 // pred_check_branch
      %59 = sbr.rel (0) target = $region41
    $region40: #{tpu_custom_call.1} parent=1 // pred_region
      %s61 = ssub.s32 16, 16
      %62 = vsyncadd [#allocation6], %s61
      %s64 = sshll.u32 [#allocation7], 4
      %s65 = int_to_ptr.vmem [resolvable:$true] %s64
      %67 = dma.hbm_to_vmem [thread:$0]  %s9, 16, %s65, [#allocation6]
    $region41: #{tpu_custom_call.1} parent=1 // pred_fallthru
      _
    // Predicated region
    $region42: #{tpu_custom_call.1} parent=1 // pred_check
      _
    $region43: #{tpu_custom_call.1} parent=1 // pred_check_branch
      %69 = sbr.rel (0) target = $region45
    $region44: #{tpu_custom_call.1} parent=1 // pred_region
      _
    $region45: #{tpu_custom_call.1} parent=1 // pred_fallthru
      _
    // Predicated region
    $region46: #{tpu_custom_call.1} parent=1 // pred_check
      _
    $region47: #{tpu_custom_call.1} parent=1 // pred_check_branch
      %71 = sbr.rel (0) target = $region49
    $region48: #{tpu_custom_call.1} parent=1 // pred_region
      _
    $region49: #{tpu_custom_call.1} parent=1 // pred_fallthru
      _
    // Predicated region
    $region50: #{tpu_custom_call.1} parent=1 // pred_check
      _
    $region51: #{tpu_custom_call.1} parent=1 // pred_check_branch
      %73 = sbr.rel (0) target = $region53
    $region52: #{tpu_custom_call.1} parent=1 // pred_region
      _
    $region53: #{tpu_custom_call.1} parent=1 // pred_fallthru
      _
    // Predicated region
    $region54: #{tpu_custom_call.1} parent=1 // pred_check
      _
    $region55: #{tpu_custom_call.1} parent=1 // pred_check_branch
      %75 = sbr.rel (0) target = $region57
    $region56: #{tpu_custom_call.1} parent=1 // pred_region
      _
    $region57: #{tpu_custom_call.1} parent=1 // pred_fallthru
      _
    // Predicated region
    $region58: #{tpu_custom_call.1} parent=1 // pred_check
      _
    $region59: #{tpu_custom_call.1} parent=1 // pred_check_branch
      %77 = sbr.rel (0) target = $region61
    $region60: #{tpu_custom_call.1} parent=1 // pred_region
      _
    $region61: #{tpu_custom_call.1} parent=1 // pred_fallthru
      _
    // Predicated region
    $region62: #{tpu_custom_call.1} parent=1 // pred_check
      _
    $region63: #{tpu_custom_call.1} parent=1 // pred_check_branch
      %79 = sbr.rel (0) target = $region65
    $region64: #{tpu_custom_call.1} parent=1 // pred_region
      _
    $region65: #{tpu_custom_call.1} parent=1 // pred_fallthru
      _
    // Predicated region
    $region66: #{tpu_custom_call.1} parent=1 // pred_check
      _
    $region67: #{tpu_custom_call.1} parent=1 // pred_check_branch
      %81 = sbr.rel (0) target = $region69
    $region68: #{tpu_custom_call.1} parent=1 // pred_region
      %82 = dma.done [#allocation3], 16
    $region69: #{tpu_custom_call.1} parent=1 // pred_fallthru
      _
    // Predicated region
    $region70: #{tpu_custom_call.1} parent=1 // pred_check
      _
    $region71: #{tpu_custom_call.1} parent=1 // pred_check_branch
      %84 = sbr.rel (0) target = $region73
    $region72: #{tpu_custom_call.1} parent=1 // pred_region
      %85 = dma.done [#allocation6], 16
    $region73: #{tpu_custom_call.1} parent=1 // pred_fallthru
      _
    // Predicated region
    $region74: #{tpu_custom_call.1} parent=1 // pred_check
      _
    $region75: #{tpu_custom_call.1} parent=1 // pred_check_branch
      %87 = sbr.rel (0) target = $region77
    $region76: #{tpu_custom_call.1} parent=1 // pred_region
      %88 = dma.done [#allocation6], 16
    $region77: #{tpu_custom_call.1} parent=1 // pred_fallthru
      _
    %v90 = vld [vmem:[%s0] sm:$0xff]
    %v91 = vld [vmem:[%s0 + $0x8] sm:$0xff]
    %v92 = vld [vmem:[%s1] sm:$0xff]
    %v93 = vld [vmem:[%s1 + $0x8] sm:$0xff]
    %v94 = vpack.c.bf16 %v91, %v90
    %v95 = vld [vmem:[%s2] sm:$0xf]
    %v96 = vld [vmem:[%s2 + $0x4] sm:$0xf]
    %v97 = vld [vmem:[%s2 + $0x8] sm:$0xf]
    %v98 = vld [vmem:[%s2 + $0xc] sm:$0xf]
    %v99 = vld [vmem:[%s3] sm:$0x1]
    %v101 = vlaneseq
    %v102 = vshrl.u32 %v101, 7
    %v103 = vsub.s32 0, %v102
    %v104 = vrot.slane %v99, %v103
    %v110 = vunpack.c.l.b16 %v95
    %v111 = vunpack.c.l.b16 %v96
    %v112 = vunpack.c.l.b16 %v97
    %v113 = vunpack.c.l.b16 %v98
    %v114 = vpack.c.b16 %v111, %v110
    %v115 = vpack.c.b16 %v113, %v112
    %vm118 = vcmask 261120
    %v120 = vsel %vm118, %v94, 0
    %122 = vmatprep.subr.bf16.mxu0 0
    %123 = vmatpush1.bf16.msra.mxu0 %v114
    %124 = vmatprep.subr.bf16.mxu0 0
    %125 = vmatpush1.bf16.msra.mxu0 %v115
    %126 = vmatprep.subr.bf16.mxu0 0
    %127 = vmatpush1.bf16.msra.mxu0 0
    %128 = vmatprep.subr.bf16.mxu0 0
    %129 = vmatpush1.bf16.msra.mxu0 0
    %130 = vmatprep.subr.bf16.mxu0 0
    %131 = vmatpush1.bf16.msra.mxu0 0
    %132 = vmatprep.subr.bf16.mxu0 0
    %133 = vmatpush1.bf16.msra.mxu0 0
    %134 = vmatprep.subr.bf16.mxu0 0
    %135 = vmatpush1.bf16.msra.mxu0 0
    %136 = vmatprep.subr.bf16.mxu0 0
    %137 = vmatpush1.bf16.msra.mxu0 0
    %138 = vmatprep.subr.bf16.mxu0 0
    %139 = vmatpush1.bf16.msra.mxu0 0
    %140 = vmatprep.subr.bf16.mxu0 0
    %141 = vmatpush1.bf16.msra.mxu0 0
    %142 = vmatprep.subr.bf16.mxu0 0
    %143 = vmatpush1.bf16.msra.mxu0 0
    %144 = vmatprep.subr.bf16.mxu0 0
    %145 = vmatpush1.bf16.msra.mxu0 0
    %146 = vmatprep.subr.bf16.mxu0 0
    %147 = vmatpush1.bf16.msra.mxu0 0
    %148 = vmatprep.subr.bf16.mxu0 0
    %149 = vmatpush1.bf16.msra.mxu0 0
    %150 = vmatprep.subr.bf16.mxu0 0
    %151 = vmatpush1.bf16.msra.mxu0 0
    %152 = vmatprep.subr.bf16.mxu0 0
    %153 = vmatpush1.bf16.msra.mxu0 0
    %154 = vmatprep.mubr.bf16.mxu0 0
    %155 = vmatmul.mubr.bf16.gmra.mrb[0].mxu0 %v120
    %v156 = vpop.f32.mrb[0].mxu0
    %v157 = vadd.f32 %v104, %v156
    %v158 = vpop.f32.mrb[0].mxu0
    %v159 = vpop.f32.mrb[0].mxu0
    %v160 = vadd.f32 %v104, %v159
    %v161 = vpop.f32.mrb[0].mxu0
    %162 = vdwg.mxu0
    %v163 = vpack.c.bf16 %v93, %v92
    %v164 = vld [vmem:[%s4] sm:$0xf]
    %v165 = vld [vmem:[%s4 + $0x4] sm:$0xf]
    %v166 = vld [vmem:[%s4 + $0x8] sm:$0xf]
    %v167 = vld [vmem:[%s4 + $0xc] sm:$0xf]
    %v168 = vld [vmem:[%s5] sm:$0x1]
    %v170 = vlaneseq
    %v171 = vshrl.u32 %v170, 7
    %v172 = vsub.s32 0, %v171
    %v173 = vrot.slane %v168, %v172
    %v179 = vunpack.c.l.b16 %v164
    %v180 = vunpack.c.l.b16 %v165
    %v181 = vunpack.c.l.b16 %v166
    %v182 = vunpack.c.l.b16 %v167
    %v183 = vpack.c.b16 %v180, %v179
    %v184 = vpack.c.b16 %v182, %v181
    %v188 = vsel %vm118, %v163, 0
    %190 = vmatprep.subr.bf16.mxu0 0
    %191 = vmatpush1.bf16.msra.mxu0 %v183
    %192 = vmatprep.subr.bf16.mxu0 0
    %193 = vmatpush1.bf16.msra.mxu0 %v184
    %194 = vmatprep.subr.bf16.mxu0 0
    %195 = vmatpush1.bf16.msra.mxu0 0
    %196 = vmatprep.subr.bf16.mxu0 0
    %197 = vmatpush1.bf16.msra.mxu0 0
    %198 = vmatprep.subr.bf16.mxu0 0
    %199 = vmatpush1.bf16.msra.mxu0 0
    %200 = vmatprep.subr.bf16.mxu0 0
    %201 = vmatpush1.bf16.msra.mxu0 0
    %202 = vmatprep.subr.bf16.mxu0 0
    %203 = vmatpush1.bf16.msra.mxu0 0
    %204 = vmatprep.subr.bf16.mxu0 0
    %205 = vmatpush1.bf16.msra.mxu0 0
    %206 = vmatprep.subr.bf16.mxu0 0
    %207 = vmatpush1.bf16.msra.mxu0 0
    %208 = vmatprep.subr.bf16.mxu0 0
    %209 = vmatpush1.bf16.msra.mxu0 0
    %210 = vmatprep.subr.bf16.mxu0 0
    %211 = vmatpush1.bf16.msra.mxu0 0
    %212 = vmatprep.subr.bf16.mxu0 0
    %213 = vmatpush1.bf16.msra.mxu0 0
    %214 = vmatprep.subr.bf16.mxu0 0
    %215 = vmatpush1.bf16.msra.mxu0 0
    %216 = vmatprep.subr.bf16.mxu0 0
    %217 = vmatpush1.bf16.msra.mxu0 0
    %218 = vmatprep.subr.bf16.mxu0 0
    %219 = vmatpush1.bf16.msra.mxu0 0
    %220 = vmatprep.subr.bf16.mxu0 0
    %221 = vmatpush1.bf16.msra.mxu0 0
    %222 = vmatprep.mubr.bf16.mxu0 0
    %223 = vmatmul.mubr.bf16.gmra.mrb[0].mxu0 %v188
    %v224 = vpop.f32.mrb[0].mxu0
    %v225 = vadd.f32 %v173, %v224
    %v226 = vpop.f32.mrb[0].mxu0
    %v227 = vpop.f32.mrb[0].mxu0
    %v228 = vadd.f32 %v173, %v227
    %v229 = vpop.f32.mrb[0].mxu0
    %230 = vdwg.mxu0
    %v231 = vpack.c.bf16 %v157, %v157
    %v232 = vpack.c.bf16 %v160, %v160
    %v233 = vpack.c.bf16 %v225, %v225
    %v234 = vpack.c.bf16 %v228, %v228
    %vm235 = vcmask 64512
    %v237 = vsel %vm235, %v231, 0
    %v240 = vsel %vm235, %v233, 0
    %242 = vmatprep.subr.bf16.mxu0 0
    %243 = vmatpush1.bf16.xpose.msra.mxu0 %v240
    %244 = vmatprep.subr.bf16.mxu0 0
    %245 = vmatpush1.bf16.xpose.msra.mxu0 0
    %246 = vmatprep.subr.bf16.mxu0 0
    %247 = vmatpush1.bf16.xpose.msra.mxu0 0
    %248 = vmatprep.subr.bf16.mxu0 0
    %249 = vmatpush1.bf16.xpose.msra.mxu0 0
    %250 = vmatprep.subr.bf16.mxu0 0
    %251 = vmatpush1.bf16.xpose.msra.mxu0 0
    %252 = vmatprep.subr.bf16.mxu0 0
    %253 = vmatpush1.bf16.xpose.msra.mxu0 0
    %254 = vmatprep.subr.bf16.mxu0 0
    %255 = vmatpush1.bf16.xpose.msra.mxu0 0
    %256 = vmatprep.subr.bf16.mxu0 0
    %257 = vmatpush1.bf16.xpose.msra.mxu0 0
    %258 = vmatprep.subr.bf16.mxu0 0
    %259 = vmatpush1.bf16.xpose.msra.mxu0 0
    %260 = vmatprep.subr.bf16.mxu0 0
    %261 = vmatpush1.bf16.xpose.msra.mxu0 0
    %262 = vmatprep.subr.bf16.mxu0 0
    %263 = vmatpush1.bf16.xpose.msra.mxu0 0
    %264 = vmatprep.subr.bf16.mxu0 0
    %265 = vmatpush1.bf16.xpose.msra.mxu0 0
    %266 = vmatprep.subr.bf16.mxu0 0
    %267 = vmatpush1.bf16.xpose.msra.mxu0 0
    %268 = vmatprep.subr.bf16.mxu0 0
    %269 = vmatpush1.bf16.xpose.msra.mxu0 0
    %270 = vmatprep.subr.bf16.mxu0 0
    %271 = vmatpush1.bf16.xpose.msra.mxu0 0
    %272 = vmatprep.subr.bf16.mxu0 0
    %273 = vmatpush1.bf16.xpose.msra.mxu0 0
    %274 = vmatprep.mubr.bf16.mxu0 0
    %275 = vmatmul.mubr.bf16.gmra.mrb[0].mxu0 %v237
    %v276 = vpop.f32.mrb[0].mxu0
    %v277 = vadd.f32 0.0, %v276
    %v278 = vpop.f32.mrb[0].mxu0
    %v279 = vpop.f32.mrb[0].mxu0
    %v280 = vpop.f32.mrb[0].mxu0
    %281 = vdwg.mxu0
    %v283 = vsel %vm235, %v232, 0
    %v286 = vsel %vm235, %v234, 0
    %288 = vmatprep.subr.bf16.mxu0 0
    %289 = vmatpush1.bf16.xpose.msra.mxu0 %v286
    %290 = vmatprep.subr.bf16.mxu0 0
    %291 = vmatpush1.bf16.xpose.msra.mxu0 0
    %292 = vmatprep.subr.bf16.mxu0 0
    %293 = vmatpush1.bf16.xpose.msra.mxu0 0
    %294 = vmatprep.subr.bf16.mxu0 0
    %295 = vmatpush1.bf16.xpose.msra.mxu0 0
    %296 = vmatprep.subr.bf16.mxu0 0
    %297 = vmatpush1.bf16.xpose.msra.mxu0 0
    %298 = vmatprep.subr.bf16.mxu0 0
    %299 = vmatpush1.bf16.xpose.msra.mxu0 0
    %300 = vmatprep.subr.bf16.mxu0 0
    %301 = vmatpush1.bf16.xpose.msra.mxu0 0
    %302 = vmatprep.subr.bf16.mxu0 0
    %303 = vmatpush1.bf16.xpose.msra.mxu0 0
    %304 = vmatprep.subr.bf16.mxu0 0
    %305 = vmatpush1.bf16.xpose.msra.mxu0 0
    %306 = vmatprep.subr.bf16.mxu0 0
    %307 = vmatpush1.bf16.xpose.msra.mxu0 0
    %308 = vmatprep.subr.bf16.mxu0 0
    %309 = vmatpush1.bf16.xpose.msra.mxu0 0
    %310 = vmatprep.subr.bf16.mxu0 0
    %311 = vmatpush1.bf16.xpose.msra.mxu0 0
    %312 = vmatprep.subr.bf16.mxu0 0
    %313 = vmatpush1.bf16.xpose.msra.mxu0 0
    %314 = vmatprep.subr.bf16.mxu0 0
    %315 = vmatpush1.bf16.xpose.msra.mxu0 0
    %316 = vmatprep.subr.bf16.mxu0 0
    %317 = vmatpush1.bf16.xpose.msra.mxu0 0
    %318 = vmatprep.subr.bf16.mxu0 0
    %319 = vmatpush1.bf16.xpose.msra.mxu0 0
    %320 = vmatprep.mubr.bf16.mxu0 0
    %321 = vmatmul.mubr.bf16.gmra.mrb[0].mxu0 %v283
    %v322 = vpop.f32.mrb[0].mxu0
    %v323 = vadd.f32 0.0, %v322
    %v324 = vpop.f32.mrb[0].mxu0
    %v325 = vpop.f32.mrb[0].mxu0
    %v326 = vpop.f32.mrb[0].mxu0
    %327 = vdwg.mxu0
    %v328 = vsel %vm235, %v277, -inf
    %329 = vmax.xlane.f32.xlu0 %v328
    %v330 = vpop.xlane.xlu0 %329
    %v331 = vsel %vm235, %v323, -inf
    %332 = vmax.xlane.f32.xlu0 %v331
    %v333 = vpop.xlane.xlu0 %332
    %v334 = vsub.f32 %v277, %v330
    %v335 = vsub.f32 %v323, %v333
    %v336 = vmul.f32 %v334, 1.442695
    %v337 = vpow.pop %v336
    %v338 = vmul.f32 %v335, 1.442695
    %v339 = vpow.pop %v338
    %v340 = vsel %vm235, %v337, 0.0
    %341 = vadd.xlane.f32.xlu0 %v340
    %v342 = vpop.xlane.xlu0 %341
    %v343 = vsel %vm235, %v339, 0.0
    %344 = vadd.xlane.f32.xlu0 %v343
    %v345 = vpop.xlane.xlu0 %344
    %v346 = vrcp.pop %v342
    %v347 = vrcp.pop %v345
    %v348 = vmul.f32 %v337, %v346
    %v349 = vmul.f32 %v339, %v347
    %v350 = vpack.c.bf16 %v348, %v348
    %v351 = vpack.c.bf16 %v349, %v349
    %353 = vrot.lane.b32.xlu0 %v233, 96
    %v354 = vpop.permute.xlu0 %353
    %v356 = vsel %vm235, %v350, 0
    %vm358 = vcmask 1043456
    %v360 = vsel %vm358, %v354, 0
    %362 = vmatprep.subr.bf16.mxu0 0
    %363 = vmatpush1.bf16.msra.mxu0 %v360
    %364 = vmatprep.subr.bf16.mxu0 0
    %365 = vmatpush1.bf16.msra.mxu0 0
    %366 = vmatprep.subr.bf16.mxu0 0
    %367 = vmatpush1.bf16.msra.mxu0 0
    %368 = vmatprep.subr.bf16.mxu0 0
    %369 = vmatpush1.bf16.msra.mxu0 0
    %370 = vmatprep.subr.bf16.mxu0 0
    %371 = vmatpush1.bf16.msra.mxu0 0
    %372 = vmatprep.subr.bf16.mxu0 0
    %373 = vmatpush1.bf16.msra.mxu0 0
    %374 = vmatprep.subr.bf16.mxu0 0
    %375 = vmatpush1.bf16.msra.mxu0 0
    %376 = vmatprep.subr.bf16.mxu0 0
    %377 = vmatpush1.bf16.msra.mxu0 0
    %378 = vmatprep.subr.bf16.mxu0 0
    %379 = vmatpush1.bf16.msra.mxu0 0
    %380 = vmatprep.subr.bf16.mxu0 0
    %381 = vmatpush1.bf16.msra.mxu0 0
    %382 = vmatprep.subr.bf16.mxu0 0
    %383 = vmatpush1.bf16.msra.mxu0 0
    %384 = vmatprep.subr.bf16.mxu0 0
    %385 = vmatpush1.bf16.msra.mxu0 0
    %386 = vmatprep.subr.bf16.mxu0 0
    %387 = vmatpush1.bf16.msra.mxu0 0
    %388 = vmatprep.subr.bf16.mxu0 0
    %389 = vmatpush1.bf16.msra.mxu0 0
    %390 = vmatprep.subr.bf16.mxu0 0
    %391 = vmatpush1.bf16.msra.mxu0 0
    %392 = vmatprep.subr.bf16.mxu0 0
    %393 = vmatpush1.bf16.msra.mxu0 0
    %394 = vmatprep.mubr.bf16.mxu0 0
    %395 = vmatmul.mubr.bf16.gmra.mrb[0].mxu0 %v356
    %v396 = vpop.f32.mrb[0].mxu0
    %v397 = vadd.f32 0.0, %v396
    %v398 = vpop.f32.mrb[0].mxu0
    %v399 = vpop.f32.mrb[0].mxu0
    %v400 = vpop.f32.mrb[0].mxu0
    %401 = vdwg.mxu0
    %403 = vrot.lane.b32.xlu0 %v234, 96
    %v404 = vpop.permute.xlu0 %403
    %v406 = vsel %vm235, %v351, 0
    %v409 = vsel %vm358, %v404, 0
    %411 = vmatprep.subr.bf16.mxu0 0
    %412 = vmatpush1.bf16.msra.mxu0 %v409
    %413 = vmatprep.subr.bf16.mxu0 0
    %414 = vmatpush1.bf16.msra.mxu0 0
    %415 = vmatprep.subr.bf16.mxu0 0
    %416 = vmatpush1.bf16.msra.mxu0 0
    %417 = vmatprep.subr.bf16.mxu0 0
    %418 = vmatpush1.bf16.msra.mxu0 0
    %419 = vmatprep.subr.bf16.mxu0 0
    %420 = vmatpush1.bf16.msra.mxu0 0
    %421 = vmatprep.subr.bf16.mxu0 0
    %422 = vmatpush1.bf16.msra.mxu0 0
    %423 = vmatprep.subr.bf16.mxu0 0
    %424 = vmatpush1.bf16.msra.mxu0 0
    %425 = vmatprep.subr.bf16.mxu0 0
    %426 = vmatpush1.bf16.msra.mxu0 0
    %427 = vmatprep.subr.bf16.mxu0 0
    %428 = vmatpush1.bf16.msra.mxu0 0
    %429 = vmatprep.subr.bf16.mxu0 0
    %430 = vmatpush1.bf16.msra.mxu0 0
    %431 = vmatprep.subr.bf16.mxu0 0
    %432 = vmatpush1.bf16.msra.mxu0 0
    %433 = vmatprep.subr.bf16.mxu0 0
    %434 = vmatpush1.bf16.msra.mxu0 0
    %435 = vmatprep.subr.bf16.mxu0 0
    %436 = vmatpush1.bf16.msra.mxu0 0
    %437 = vmatprep.subr.bf16.mxu0 0
    %438 = vmatpush1.bf16.msra.mxu0 0
    %439 = vmatprep.subr.bf16.mxu0 0
    %440 = vmatpush1.bf16.msra.mxu0 0
    %441 = vmatprep.subr.bf16.mxu0 0
    %442 = vmatpush1.bf16.msra.mxu0 0
    %443 = vmatprep.mubr.bf16.mxu0 0
    %444 = vmatmul.mubr.bf16.gmra.mrb[0].mxu0 %v406
    %v445 = vpop.f32.mrb[0].mxu0
    %v446 = vadd.f32 0.0, %v445
    %v447 = vpop.f32.mrb[0].mxu0
    %v448 = vpop.f32.mrb[0].mxu0
    %v449 = vpop.f32.mrb[0].mxu0
    %450 = vdwg.mxu0
    %v451 = vpack.c.bf16 %v446, %v397
    %v452 = vld [vmem:[%s6] sm:$0xf]
    %454 = vrot.lane.b32.xlu0 %v231, 120
    %v455 = vpop.permute.xlu0 %454
    %456 = vrot.lane.b32.xlu0 %v233, 120
    %v457 = vpop.permute.xlu0 %456
    %v459 = vsel %vm235, %v455, 0
    %v462 = vsel %vm235, %v457, 0
    %464 = vmatprep.subr.bf16.mxu0 0
    %465 = vmatpush1.bf16.xpose.msra.mxu0 %v462
    %466 = vmatprep.subr.bf16.mxu0 0
    %467 = vmatpush1.bf16.xpose.msra.mxu0 0
    %468 = vmatprep.subr.bf16.mxu0 0
    %469 = vmatpush1.bf16.xpose.msra.mxu0 0
    %470 = vmatprep.subr.bf16.mxu0 0
    %471 = vmatpush1.bf16.xpose.msra.mxu0 0
    %472 = vmatprep.subr.bf16.mxu0 0
    %473 = vmatpush1.bf16.xpose.msra.mxu0 0
    %474 = vmatprep.subr.bf16.mxu0 0
    %475 = vmatpush1.bf16.xpose.msra.mxu0 0
    %476 = vmatprep.subr.bf16.mxu0 0
    %477 = vmatpush1.bf16.xpose.msra.mxu0 0
    %478 = vmatprep.subr.bf16.mxu0 0
    %479 = vmatpush1.bf16.xpose.msra.mxu0 0
    %480 = vmatprep.subr.bf16.mxu0 0
    %481 = vmatpush1.bf16.xpose.msra.mxu0 0
    %482 = vmatprep.subr.bf16.mxu0 0
    %483 = vmatpush1.bf16.xpose.msra.mxu0 0
    %484 = vmatprep.subr.bf16.mxu0 0
    %485 = vmatpush1.bf16.xpose.msra.mxu0 0
    %486 = vmatprep.subr.bf16.mxu0 0
    %487 = vmatpush1.bf16.xpose.msra.mxu0 0
    %488 = vmatprep.subr.bf16.mxu0 0
    %489 = vmatpush1.bf16.xpose.msra.mxu0 0
    %490 = vmatprep.subr.bf16.mxu0 0
    %491 = vmatpush1.bf16.xpose.msra.mxu0 0
    %492 = vmatprep.subr.bf16.mxu0 0
    %493 = vmatpush1.bf16.xpose.msra.mxu0 0
    %494 = vmatprep.subr.bf16.mxu0 0
    %495 = vmatpush1.bf16.xpose.msra.mxu0 0
    %496 = vmatprep.mubr.bf16.mxu0 0
    %497 = vmatmul.mubr.bf16.gmra.mrb[0].mxu0 %v459
    %v498 = vpop.f32.mrb[0].mxu0
    %v499 = vadd.f32 0.0, %v498
    %v500 = vpop.f32.mrb[0].mxu0
    %v501 = vpop.f32.mrb[0].mxu0
    %v502 = vpop.f32.mrb[0].mxu0
    %503 = vdwg.mxu0
    %505 = vrot.lane.b32.xlu0 %v232, 120
    %v506 = vpop.permute.xlu0 %505
    %507 = vrot.lane.b32.xlu0 %v234, 120
    %v508 = vpop.permute.xlu0 %507
    %v510 = vsel %vm235, %v506, 0
    %v513 = vsel %vm235, %v508, 0
    %515 = vmatprep.subr.bf16.mxu0 0
    %516 = vmatpush1.bf16.xpose.msra.mxu0 %v513
    %517 = vmatprep.subr.bf16.mxu0 0
    %518 = vmatpush1.bf16.xpose.msra.mxu0 0
    %519 = vmatprep.subr.bf16.mxu0 0
    %520 = vmatpush1.bf16.xpose.msra.mxu0 0
    %521 = vmatprep.subr.bf16.mxu0 0
    %522 = vmatpush1.bf16.xpose.msra.mxu0 0
    %523 = vmatprep.subr.bf16.mxu0 0
    %524 = vmatpush1.bf16.xpose.msra.mxu0 0
    %525 = vmatprep.subr.bf16.mxu0 0
    %526 = vmatpush1.bf16.xpose.msra.mxu0 0
    %527 = vmatprep.subr.bf16.mxu0 0
    %528 = vmatpush1.bf16.xpose.msra.mxu0 0
    %529 = vmatprep.subr.bf16.mxu0 0
    %530 = vmatpush1.bf16.xpose.msra.mxu0 0
    %531 = vmatprep.subr.bf16.mxu0 0
    %532 = vmatpush1.bf16.xpose.msra.mxu0 0
    %533 = vmatprep.subr.bf16.mxu0 0
    %534 = vmatpush1.bf16.xpose.msra.mxu0 0
    %535 = vmatprep.subr.bf16.mxu0 0
    %536 = vmatpush1.bf16.xpose.msra.mxu0 0
    %537 = vmatprep.subr.bf16.mxu0 0
    %538 = vmatpush1.bf16.xpose.msra.mxu0 0
    %539 = vmatprep.subr.bf16.mxu0 0
    %540 = vmatpush1.bf16.xpose.msra.mxu0 0
    %541 = vmatprep.subr.bf16.mxu0 0
    %542 = vmatpush1.bf16.xpose.msra.mxu0 0
    %543 = vmatprep.subr.bf16.mxu0 0
    %544 = vmatpush1.bf16.xpose.msra.mxu0 0
    %545 = vmatprep.subr.bf16.mxu0 0
    %546 = vmatpush1.bf16.xpose.msra.mxu0 0
    %547 = vmatprep.mubr.bf16.mxu0 0
    %548 = vmatmul.mubr.bf16.gmra.mrb[0].mxu0 %v510
    %v549 = vpop.f32.mrb[0].mxu0
    %v550 = vadd.f32 0.0, %v549
    %v551 = vpop.f32.mrb[0].mxu0
    %v552 = vpop.f32.mrb[0].mxu0
    %v553 = vpop.f32.mrb[0].mxu0
    %554 = vdwg.mxu0
    %v555 = vsel %vm235, %v499, -inf
    %556 = vmax.xlane.f32.xlu0 %v555
    %v557 = vpop.xlane.xlu0 %556
    %v558 = vsel %vm235, %v550, -inf
    %559 = vmax.xlane.f32.xlu0 %v558
    %v560 = vpop.xlane.xlu0 %559
    %v561 = vsub.f32 %v499, %v557
    %v562 = vsub.f32 %v550, %v560
    %v563 = vmul.f32 %v561, 1.442695
    %v564 = vpow.pop %v563
    %v565 = vmul.f32 %v562, 1.442695
    %v566 = vpow.pop %v565
    %v567 = vsel %vm235, %v564, 0.0
    %568 = vadd.xlane.f32.xlu0 %v567
    %v569 = vpop.xlane.xlu0 %568
    %v570 = vsel %vm235, %v566, 0.0
    %571 = vadd.xlane.f32.xlu0 %v570
    %v572 = vpop.xlane.xlu0 %571
    %v573 = vrcp.pop %v569
    %v574 = vrcp.pop %v572
    %v575 = vmul.f32 %v564, %v573
    %v576 = vmul.f32 %v566, %v574
    %v577 = vpack.c.bf16 %v575, %v575
    %v578 = vpack.c.bf16 %v576, %v576
    %579 = vrot.lane.b32.xlu0 %v233, 88
    %v580 = vpop.permute.xlu0 %579
    %v582 = vsel %vm235, %v577, 0
    %v585 = vsel %vm358, %v580, 0
    %587 = vmatprep.subr.bf16.mxu0 0
    %588 = vmatpush1.bf16.msra.mxu0 %v585
    %589 = vmatprep.subr.bf16.mxu0 0
    %590 = vmatpush1.bf16.msra.mxu0 0
    %591 = vmatprep.subr.bf16.mxu0 0
    %592 = vmatpush1.bf16.msra.mxu0 0
    %593 = vmatprep.subr.bf16.mxu0 0
    %594 = vmatpush1.bf16.msra.mxu0 0
    %595 = vmatprep.subr.bf16.mxu0 0
    %596 = vmatpush1.bf16.msra.mxu0 0
    %597 = vmatprep.subr.bf16.mxu0 0
    %598 = vmatpush1.bf16.msra.mxu0 0
    %599 = vmatprep.subr.bf16.mxu0 0
    %600 = vmatpush1.bf16.msra.mxu0 0
    %601 = vmatprep.subr.bf16.mxu0 0
    %602 = vmatpush1.bf16.msra.mxu0 0
    %603 = vmatprep.subr.bf16.mxu0 0
    %604 = vmatpush1.bf16.msra.mxu0 0
    %605 = vmatprep.subr.bf16.mxu0 0
    %606 = vmatpush1.bf16.msra.mxu0 0
    %607 = vmatprep.subr.bf16.mxu0 0
    %608 = vmatpush1.bf16.msra.mxu0 0
    %609 = vmatprep.subr.bf16.mxu0 0
    %610 = vmatpush1.bf16.msra.mxu0 0
    %611 = vmatprep.subr.bf16.mxu0 0
    %612 = vmatpush1.bf16.msra.mxu0 0
    %613 = vmatprep.subr.bf16.mxu0 0
    %614 = vmatpush1.bf16.msra.mxu0 0
    %615 = vmatprep.subr.bf16.mxu0 0
    %616 = vmatpush1.bf16.msra.mxu0 0
    %617 = vmatprep.subr.bf16.mxu0 0
    %618 = vmatpush1.bf16.msra.mxu0 0
    %619 = vmatprep.mubr.bf16.mxu0 0
    %620 = vmatmul.mubr.bf16.gmra.mrb[0].mxu0 %v582
    %v621 = vpop.f32.mrb[0].mxu0
    %v622 = vadd.f32 0.0, %v621
    %v623 = vpop.f32.mrb[0].mxu0
    %v624 = vpop.f32.mrb[0].mxu0
    %v625 = vpop.f32.mrb[0].mxu0
    %626 = vdwg.mxu0
    %627 = vrot.lane.b32.xlu0 %v234, 88
    %v628 = vpop.permute.xlu0 %627
    %v630 = vsel %vm235, %v578, 0
    %v633 = vsel %vm358, %v628, 0
    %635 = vmatprep.subr.bf16.mxu0 0
    %636 = vmatpush1.bf16.msra.mxu0 %v633
    %637 = vmatprep.subr.bf16.mxu0 0
    %638 = vmatpush1.bf16.msra.mxu0 0
    %639 = vmatprep.subr.bf16.mxu0 0
    %640 = vmatpush1.bf16.msra.mxu0 0
    %641 = vmatprep.subr.bf16.mxu0 0
    %642 = vmatpush1.bf16.msra.mxu0 0
    %643 = vmatprep.subr.bf16.mxu0 0
    %644 = vmatpush1.bf16.msra.mxu0 0
    %645 = vmatprep.subr.bf16.mxu0 0
    %646 = vmatpush1.bf16.msra.mxu0 0
    %647 = vmatprep.subr.bf16.mxu0 0
    %648 = vmatpush1.bf16.msra.mxu0 0
    %649 = vmatprep.subr.bf16.mxu0 0
    %650 = vmatpush1.bf16.msra.mxu0 0
    %651 = vmatprep.subr.bf16.mxu0 0
    %652 = vmatpush1.bf16.msra.mxu0 0
    %653 = vmatprep.subr.bf16.mxu0 0
    %654 = vmatpush1.bf16.msra.mxu0 0
    %655 = vmatprep.subr.bf16.mxu0 0
    %656 = vmatpush1.bf16.msra.mxu0 0
    %657 = vmatprep.subr.bf16.mxu0 0
    %658 = vmatpush1.bf16.msra.mxu0 0
    %659 = vmatprep.subr.bf16.mxu0 0
    %660 = vmatpush1.bf16.msra.mxu0 0
    %661 = vmatprep.subr.bf16.mxu0 0
    %662 = vmatpush1.bf16.msra.mxu0 0
    %663 = vmatprep.subr.bf16.mxu0 0
    %664 = vmatpush1.bf16.msra.mxu0 0
    %665 = vmatprep.subr.bf16.mxu0 0
    %666 = vmatpush1.bf16.msra.mxu0 0
    %667 = vmatprep.mubr.bf16.mxu0 0
    %668 = vmatmul.mubr.bf16.gmra.mrb[0].mxu0 %v630
    %v669 = vpop.f32.mrb[0].mxu0
    %v670 = vadd.f32 0.0, %v669
    %v671 = vpop.f32.mrb[0].mxu0
    %v672 = vpop.f32.mrb[0].mxu0
    %v673 = vpop.f32.mrb[0].mxu0
    %674 = vdwg.mxu0
    %v675 = vpack.c.bf16 %v670, %v622
    %s676 = scalar_lea.vmem %s6, 4
    %v677 = vld [vmem:[%s676] sm:$0xf]
    %v679 = vsel %vm235, %v675, 0
    %v682 = vsel %vm358, %v677, 0
    %684 = vmatprep.subr.bf16.mxu0 0
    %685 = vmatpush1.bf16.msra.mxu0 %v682
    %686 = vmatprep.subr.bf16.mxu0 0
    %687 = vmatpush1.bf16.msra.mxu0 0
    %688 = vmatprep.subr.bf16.mxu0 0
    %689 = vmatpush1.bf16.msra.mxu0 0
    %690 = vmatprep.subr.bf16.mxu0 0
    %691 = vmatpush1.bf16.msra.mxu0 0
    %692 = vmatprep.subr.bf16.mxu0 0
    %693 = vmatpush1.bf16.msra.mxu0 0
    %694 = vmatprep.subr.bf16.mxu0 0
    %695 = vmatpush1.bf16.msra.mxu0 0
    %696 = vmatprep.subr.bf16.mxu0 0
    %697 = vmatpush1.bf16.msra.mxu0 0
    %698 = vmatprep.subr.bf16.mxu0 0
    %699 = vmatpush1.bf16.msra.mxu0 0
    %700 = vmatprep.subr.bf16.mxu0 0
    %701 = vmatpush1.bf16.msra.mxu0 0
    %702 = vmatprep.subr.bf16.mxu0 0
    %703 = vmatpush1.bf16.msra.mxu0 0
    %704 = vmatprep.subr.bf16.mxu0 0
    %705 = vmatpush1.bf16.msra.mxu0 0
    %706 = vmatprep.subr.bf16.mxu0 0
    %707 = vmatpush1.bf16.msra.mxu0 0
    %708 = vmatprep.subr.bf16.mxu0 0
    %709 = vmatpush1.bf16.msra.mxu0 0
    %710 = vmatprep.subr.bf16.mxu0 0
    %711 = vmatpush1.bf16.msra.mxu0 0
    %712 = vmatprep.subr.bf16.mxu0 0
    %713 = vmatpush1.bf16.msra.mxu0 0
    %714 = vmatprep.subr.bf16.mxu0 0
    %715 = vmatpush1.bf16.msra.mxu0 0
    %716 = vmatprep.mubr.bf16.mxu0 0
    %717 = vmatmul.mubr.bf16.gmra.mrb[0].mxu0 %v679
    %v718 = vpop.f32.mrb[0].mxu0
    %v719 = vadd.f32 0.0, %v718
    %v720 = vpop.f32.mrb[0].mxu0
    %v721 = vpop.f32.mrb[0].mxu0
    %v722 = vadd.f32 0.0, %v721
    %v723 = vpop.f32.mrb[0].mxu0
    %724 = vdwg.mxu0
    %v726 = vsel %vm235, %v451, 0
    %v729 = vsel %vm358, %v452, 0
    %731 = vmatprep.subr.bf16.mxu0 0
    %732 = vmatpush1.bf16.msra.mxu0 %v729
    %733 = vmatprep.subr.bf16.mxu0 0
    %734 = vmatpush1.bf16.msra.mxu0 0
    %735 = vmatprep.subr.bf16.mxu0 0
    %736 = vmatpush1.bf16.msra.mxu0 0
    %737 = vmatprep.subr.bf16.mxu0 0
    %738 = vmatpush1.bf16.msra.mxu0 0
    %739 = vmatprep.subr.bf16.mxu0 0
    %740 = vmatpush1.bf16.msra.mxu0 0
    %741 = vmatprep.subr.bf16.mxu0 0
    %742 = vmatpush1.bf16.msra.mxu0 0
    %743 = vmatprep.subr.bf16.mxu0 0
    %744 = vmatpush1.bf16.msra.mxu0 0
    %745 = vmatprep.subr.bf16.mxu0 0
    %746 = vmatpush1.bf16.msra.mxu0 0
    %747 = vmatprep.subr.bf16.mxu0 0
    %748 = vmatpush1.bf16.msra.mxu0 0
    %749 = vmatprep.subr.bf16.mxu0 0
    %750 = vmatpush1.bf16.msra.mxu0 0
    %751 = vmatprep.subr.bf16.mxu0 0
    %752 = vmatpush1.bf16.msra.mxu0 0
    %753 = vmatprep.subr.bf16.mxu0 0
    %754 = vmatpush1.bf16.msra.mxu0 0
    %755 = vmatprep.subr.bf16.mxu0 0
    %756 = vmatpush1.bf16.msra.mxu0 0
    %757 = vmatprep.subr.bf16.mxu0 0
    %758 = vmatpush1.bf16.msra.mxu0 0
    %759 = vmatprep.subr.bf16.mxu0 0
    %760 = vmatpush1.bf16.msra.mxu0 0
    %761 = vmatprep.subr.bf16.mxu0 0
    %762 = vmatpush1.bf16.msra.mxu0 0
    %763 = vmatprep.mubr.bf16.mxu0 0
    %764 = vmatmul.mubr.bf16.gmra.mrb[0].mxu0 %v726
    %v765 = vpop.f32.mrb[0].mxu0
    %v766 = vadd.f32 %v719, %v765
    %v767 = vpop.f32.mrb[0].mxu0
    %v768 = vpop.f32.mrb[0].mxu0
    %v769 = vadd.f32 %v722, %v768
    %v770 = vpop.f32.mrb[0].mxu0
    %771 = vdwg.mxu0
    %772 = vrot.lane.b32.xlu0 %v231, 112
    %v773 = vpop.permute.xlu0 %772
    %774 = vrot.lane.b32.xlu0 %v233, 112
    %v775 = vpop.permute.xlu0 %774
    %v777 = vsel %vm235, %v773, 0
    %v780 = vsel %vm235, %v775, 0
    %782 = vmatprep.subr.bf16.mxu0 0
    %783 = vmatpush1.bf16.xpose.msra.mxu0 %v780
    %784 = vmatprep.subr.bf16.mxu0 0
    %785 = vmatpush1.bf16.xpose.msra.mxu0 0
    %786 = vmatprep.subr.bf16.mxu0 0
    %787 = vmatpush1.bf16.xpose.msra.mxu0 0
    %788 = vmatprep.subr.bf16.mxu0 0
    %789 = vmatpush1.bf16.xpose.msra.mxu0 0
    %790 = vmatprep.subr.bf16.mxu0 0
    %791 = vmatpush1.bf16.xpose.msra.mxu0 0
    %792 = vmatprep.subr.bf16.mxu0 0
    %793 = vmatpush1.bf16.xpose.msra.mxu0 0
    %794 = vmatprep.subr.bf16.mxu0 0
    %795 = vmatpush1.bf16.xpose.msra.mxu0 0
    %796 = vmatprep.subr.bf16.mxu0 0
    %797 = vmatpush1.bf16.xpose.msra.mxu0 0
    %798 = vmatprep.subr.bf16.mxu0 0
    %799 = vmatpush1.bf16.xpose.msra.mxu0 0
    %800 = vmatprep.subr.bf16.mxu0 0
    %801 = vmatpush1.bf16.xpose.msra.mxu0 0
    %802 = vmatprep.subr.bf16.mxu0 0
    %803 = vmatpush1.bf16.xpose.msra.mxu0 0
    %804 = vmatprep.subr.bf16.mxu0 0
    %805 = vmatpush1.bf16.xpose.msra.mxu0 0
    %806 = vmatprep.subr.bf16.mxu0 0
    %807 = vmatpush1.bf16.xpose.msra.mxu0 0
    %808 = vmatprep.subr.bf16.mxu0 0
    %809 = vmatpush1.bf16.xpose.msra.mxu0 0
    %810 = vmatprep.subr.bf16.mxu0 0
    %811 = vmatpush1.bf16.xpose.msra.mxu0 0
    %812 = vmatprep.subr.bf16.mxu0 0
    %813 = vmatpush1.bf16.xpose.msra.mxu0 0
    %814 = vmatprep.mubr.bf16.mxu0 0
    %815 = vmatmul.mubr.bf16.gmra.mrb[0].mxu0 %v777
    %v816 = vpop.f32.mrb[0].mxu0
    %v817 = vadd.f32 0.0, %v816
    %v818 = vpop.f32.mrb[0].mxu0
    %v819 = vpop.f32.mrb[0].mxu0
    %v820 = vpop.f32.mrb[0].mxu0
    %821 = vdwg.mxu0
    %822 = vrot.lane.b32.xlu0 %v232, 112
    %v823 = vpop.permute.xlu0 %822
    %824 = vrot.lane.b32.xlu0 %v234, 112
    %v825 = vpop.permute.xlu0 %824
    %v827 = vsel %vm235, %v823, 0
    %v830 = vsel %vm235, %v825, 0
    %832 = vmatprep.subr.bf16.mxu0 0
    %833 = vmatpush1.bf16.xpose.msra.mxu0 %v830
    %834 = vmatprep.subr.bf16.mxu0 0
    %835 = vmatpush1.bf16.xpose.msra.mxu0 0
    %836 = vmatprep.subr.bf16.mxu0 0
    %837 = vmatpush1.bf16.xpose.msra.mxu0 0
    %838 = vmatprep.subr.bf16.mxu0 0
    %839 = vmatpush1.bf16.xpose.msra.mxu0 0
    %840 = vmatprep.subr.bf16.mxu0 0
    %841 = vmatpush1.bf16.xpose.msra.mxu0 0
    %842 = vmatprep.subr.bf16.mxu0 0
    %843 = vmatpush1.bf16.xpose.msra.mxu0 0
    %844 = vmatprep.subr.bf16.mxu0 0
    %845 = vmatpush1.bf16.xpose.msra.mxu0 0
    %846 = vmatprep.subr.bf16.mxu0 0
    %847 = vmatpush1.bf16.xpose.msra.mxu0 0
    %848 = vmatprep.subr.bf16.mxu0 0
    %849 = vmatpush1.bf16.xpose.msra.mxu0 0
    %850 = vmatprep.subr.bf16.mxu0 0
    %851 = vmatpush1.bf16.xpose.msra.mxu0 0
    %852 = vmatprep.subr.bf16.mxu0 0
    %853 = vmatpush1.bf16.xpose.msra.mxu0 0
    %854 = vmatprep.subr.bf16.mxu0 0
    %855 = vmatpush1.bf16.xpose.msra.mxu0 0
    %856 = vmatprep.subr.bf16.mxu0 0
    %857 = vmatpush1.bf16.xpose.msra.mxu0 0
    %858 = vmatprep.subr.bf16.mxu0 0
    %859 = vmatpush1.bf16.xpose.msra.mxu0 0
    %860 = vmatprep.subr.bf16.mxu0 0
    %861 = vmatpush1.bf16.xpose.msra.mxu0 0
    %862 = vmatprep.subr.bf16.mxu0 0
    %863 = vmatpush1.bf16.xpose.msra.mxu0 0
    %864 = vmatprep.mubr.bf16.mxu0 0
    %865 = vmatmul.mubr.bf16.gmra.mrb[0].mxu0 %v827
    %v866 = vpop.f32.mrb[0].mxu0
    %v867 = vadd.f32 0.0, %v866
    %v868 = vpop.f32.mrb[0].mxu0
    %v869 = vpop.f32.mrb[0].mxu0
    %v870 = vpop.f32.mrb[0].mxu0
    %871 = vdwg.mxu0
    %v872 = vsel %vm235, %v817, -inf
    %873 = vmax.xlane.f32.xlu0 %v872
    %v874 = vpop.xlane.xlu0 %873
    %v875 = vsel %vm235, %v867, -inf
    %876 = vmax.xlane.f32.xlu0 %v875
    %v877 = vpop.xlane.xlu0 %876
    %v878 = vsub.f32 %v817, %v874
    %v879 = vsub.f32 %v867, %v877
    %v880 = vmul.f32 %v878, 1.442695
    %v881 = vpow.pop %v880
    %v882 = vmul.f32 %v879, 1.442695
    %v883 = vpow.pop %v882
    %v884 = vsel %vm235, %v881, 0.0
    %885 = vadd.xlane.f32.xlu0 %v884
    %v886 = vpop.xlane.xlu0 %885
    %v887 = vsel %vm235, %v883, 0.0
    %888 = vadd.xlane.f32.xlu0 %v887
    %v889 = vpop.xlane.xlu0 %888
    %v890 = vrcp.pop %v886
    %v891 = vrcp.pop %v889
    %v892 = vmul.f32 %v881, %v890
    %v893 = vmul.f32 %v883, %v891
    %v894 = vpack.c.bf16 %v892, %v892
    %v895 = vpack.c.bf16 %v893, %v893
    %896 = vrot.lane.b32.xlu0 %v233, 80
    %v897 = vpop.permute.xlu0 %896
    %v899 = vsel %vm235, %v894, 0
    %v902 = vsel %vm358, %v897, 0
    %904 = vmatprep.subr.bf16.mxu0 0
    %905 = vmatpush1.bf16.msra.mxu0 %v902
    %906 = vmatprep.subr.bf16.mxu0 0
    %907 = vmatpush1.bf16.msra.mxu0 0
    %908 = vmatprep.subr.bf16.mxu0 0
    %909 = vmatpush1.bf16.msra.mxu0 0
    %910 = vmatprep.subr.bf16.mxu0 0
    %911 = vmatpush1.bf16.msra.mxu0 0
    %912 = vmatprep.subr.bf16.mxu0 0
    %913 = vmatpush1.bf16.msra.mxu0 0
    %914 = vmatprep.subr.bf16.mxu0 0
    %915 = vmatpush1.bf16.msra.mxu0 0
    %916 = vmatprep.subr.bf16.mxu0 0
    %917 = vmatpush1.bf16.msra.mxu0 0
    %918 = vmatprep.subr.bf16.mxu0 0
    %919 = vmatpush1.bf16.msra.mxu0 0
    %920 = vmatprep.subr.bf16.mxu0 0
    %921 = vmatpush1.bf16.msra.mxu0 0
    %922 = vmatprep.subr.bf16.mxu0 0
    %923 = vmatpush1.bf16.msra.mxu0 0
    %924 = vmatprep.subr.bf16.mxu0 0
    %925 = vmatpush1.bf16.msra.mxu0 0
    %926 = vmatprep.subr.bf16.mxu0 0
    %927 = vmatpush1.bf16.msra.mxu0 0
    %928 = vmatprep.subr.bf16.mxu0 0
    %929 = vmatpush1.bf16.msra.mxu0 0
    %930 = vmatprep.subr.bf16.mxu0 0
    %931 = vmatpush1.bf16.msra.mxu0 0
    %932 = vmatprep.subr.bf16.mxu0 0
    %933 = vmatpush1.bf16.msra.mxu0 0
    %934 = vmatprep.subr.bf16.mxu0 0
    %935 = vmatpush1.bf16.msra.mxu0 0
    %936 = vmatprep.mubr.bf16.mxu0 0
    %937 = vmatmul.mubr.bf16.gmra.mrb[0].mxu0 %v899
    %v938 = vpop.f32.mrb[0].mxu0
    %v939 = vadd.f32 0.0, %v938
    %v940 = vpop.f32.mrb[0].mxu0
    %v941 = vpop.f32.mrb[0].mxu0
    %v942 = vpop.f32.mrb[0].mxu0
    %943 = vdwg.mxu0
    %944 = vrot.lane.b32.xlu0 %v234, 80
    %v945 = vpop.permute.xlu0 %944
    %v947 = vsel %vm235, %v895, 0
    %v950 = vsel %vm358, %v945, 0
    %952 = vmatprep.subr.bf16.mxu0 0
    %953 = vmatpush1.bf16.msra.mxu0 %v950
    %954 = vmatprep.subr.bf16.mxu0 0
    %955 = vmatpush1.bf16.msra.mxu0 0
    %956 = vmatprep.subr.bf16.mxu0 0
    %957 = vmatpush1.bf16.msra.mxu0 0
    %958 = vmatprep.subr.bf16.mxu0 0
    %959 = vmatpush1.bf16.msra.mxu0 0
    %960 = vmatprep.subr.bf16.mxu0 0
    %961 = vmatpush1.bf16.msra.mxu0 0
    %962 = vmatprep.subr.bf16.mxu0 0
    %963 = vmatpush1.bf16.msra.mxu0 0
    %964 = vmatprep.subr.bf16.mxu0 0
    %965 = vmatpush1.bf16.msra.mxu0 0
    %966 = vmatprep.subr.bf16.mxu0 0
    %967 = vmatpush1.bf16.msra.mxu0 0
    %968 = vmatprep.subr.bf16.mxu0 0
    %969 = vmatpush1.bf16.msra.mxu0 0
    %970 = vmatprep.subr.bf16.mxu0 0
    %971 = vmatpush1.bf16.msra.mxu0 0
    %972 = vmatprep.subr.bf16.mxu0 0
    %973 = vmatpush1.bf16.msra.mxu0 0
    %974 = vmatprep.subr.bf16.mxu0 0
    %975 = vmatpush1.bf16.msra.mxu0 0
    %976 = vmatprep.subr.bf16.mxu0 0
    %977 = vmatpush1.bf16.msra.mxu0 0
    %978 = vmatprep.subr.bf16.mxu0 0
    %979 = vmatpush1.bf16.msra.mxu0 0
    %980 = vmatprep.subr.bf16.mxu0 0
    %981 = vmatpush1.bf16.msra.mxu0 0
    %982 = vmatprep.subr.bf16.mxu0 0
    %983 = vmatpush1.bf16.msra.mxu0 0
    %984 = vmatprep.mubr.bf16.mxu0 0
    %985 = vmatmul.mubr.bf16.gmra.mrb[0].mxu0 %v947
    %v986 = vpop.f32.mrb[0].mxu0
    %v987 = vadd.f32 0.0, %v986
    %v988 = vpop.f32.mrb[0].mxu0
    %v989 = vpop.f32.mrb[0].mxu0
    %v990 = vpop.f32.mrb[0].mxu0
    %991 = vdwg.mxu0
    %v992 = vpack.c.bf16 %v987, %v939
    %s993 = scalar_lea.vmem %s6, 8
    %v994 = vld [vmem:[%s993] sm:$0xf]
    %v996 = vsel %vm235, %v992, 0
    %v999 = vsel %vm358, %v994, 0
    %1001 = vmatprep.subr.bf16.mxu0 0
    %1002 = vmatpush1.bf16.msra.mxu0 %v999
    %1003 = vmatprep.subr.bf16.mxu0 0
    %1004 = vmatpush1.bf16.msra.mxu0 0
    %1005 = vmatprep.subr.bf16.mxu0 0
    %1006 = vmatpush1.bf16.msra.mxu0 0
    %1007 = vmatprep.subr.bf16.mxu0 0
    %1008 = vmatpush1.bf16.msra.mxu0 0
    %1009 = vmatprep.subr.bf16.mxu0 0
    %1010 = vmatpush1.bf16.msra.mxu0 0
    %1011 = vmatprep.subr.bf16.mxu0 0
    %1012 = vmatpush1.bf16.msra.mxu0 0
    %1013 = vmatprep.subr.bf16.mxu0 0
    %1014 = vmatpush1.bf16.msra.mxu0 0
    %1015 = vmatprep.subr.bf16.mxu0 0
    %1016 = vmatpush1.bf16.msra.mxu0 0
    %1017 = vmatprep.subr.bf16.mxu0 0
    %1018 = vmatpush1.bf16.msra.mxu0 0
    %1019 = vmatprep.subr.bf16.mxu0 0
    %1020 = vmatpush1.bf16.msra.mxu0 0
    %1021 = vmatprep.subr.bf16.mxu0 0
    %1022 = vmatpush1.bf16.msra.mxu0 0
    %1023 = vmatprep.subr.bf16.mxu0 0
    %1024 = vmatpush1.bf16.msra.mxu0 0
    %1025 = vmatprep.subr.bf16.mxu0 0
    %1026 = vmatpush1.bf16.msra.mxu0 0
    %1027 = vmatprep.subr.bf16.mxu0 0
    %1028 = vmatpush1.bf16.msra.mxu0 0
    %1029 = vmatprep.subr.bf16.mxu0 0
    %1030 = vmatpush1.bf16.msra.mxu0 0
    %1031 = vmatprep.subr.bf16.mxu0 0
    %1032 = vmatpush1.bf16.msra.mxu0 0
    %1033 = vmatprep.mubr.bf16.mxu0 0
    %1034 = vmatmul.mubr.bf16.gmra.mrb[0].mxu0 %v996
    %v1035 = vpop.f32.mrb[0].mxu0
    %v1036 = vadd.f32 0.0, %v1035
    %v1037 = vpop.f32.mrb[0].mxu0
    %v1038 = vpop.f32.mrb[0].mxu0
    %v1039 = vadd.f32 0.0, %v1038
    %v1040 = vpop.f32.mrb[0].mxu0
    %1041 = vdwg.mxu0
    %v1042 = vadd.f32 %v766, %v1036
    %v1043 = vadd.f32 %v769, %v1039
    %1044 = vrot.lane.b32.xlu0 %v231, 104
    %v1045 = vpop.permute.xlu0 %1044
    %1046 = vrot.lane.b32.xlu0 %v233, 104
    %v1047 = vpop.permute.xlu0 %1046
    %v1049 = vsel %vm235, %v1045, 0
    %v1052 = vsel %vm235, %v1047, 0
    %1054 = vmatprep.subr.bf16.mxu0 0
    %1055 = vmatpush1.bf16.xpose.msra.mxu0 %v1052
    %1056 = vmatprep.subr.bf16.mxu0 0
    %1057 = vmatpush1.bf16.xpose.msra.mxu0 0
    %1058 = vmatprep.subr.bf16.mxu0 0
    %1059 = vmatpush1.bf16.xpose.msra.mxu0 0
    %1060 = vmatprep.subr.bf16.mxu0 0
    %1061 = vmatpush1.bf16.xpose.msra.mxu0 0
    %1062 = vmatprep.subr.bf16.mxu0 0
    %1063 = vmatpush1.bf16.xpose.msra.mxu0 0
    %1064 = vmatprep.subr.bf16.mxu0 0
    %1065 = vmatpush1.bf16.xpose.msra.mxu0 0
    %1066 = vmatprep.subr.bf16.mxu0 0
    %1067 = vmatpush1.bf16.xpose.msra.mxu0 0
    %1068 = vmatprep.subr.bf16.mxu0 0
    %1069 = vmatpush1.bf16.xpose.msra.mxu0 0
    %1070 = vmatprep.subr.bf16.mxu0 0
    %1071 = vmatpush1.bf16.xpose.msra.mxu0 0
    %1072 = vmatprep.subr.bf16.mxu0 0
    %1073 = vmatpush1.bf16.xpose.msra.mxu0 0
    %1074 = vmatprep.subr.bf16.mxu0 0
    %1075 = vmatpush1.bf16.xpose.msra.mxu0 0
    %1076 = vmatprep.subr.bf16.mxu0 0
    %1077 = vmatpush1.bf16.xpose.msra.mxu0 0
    %1078 = vmatprep.subr.bf16.mxu0 0
    %1079 = vmatpush1.bf16.xpose.msra.mxu0 0
    %1080 = vmatprep.subr.bf16.mxu0 0
    %1081 = vmatpush1.bf16.xpose.msra.mxu0 0
    %1082 = vmatprep.subr.bf16.mxu0 0
    %1083 = vmatpush1.bf16.xpose.msra.mxu0 0
    %1084 = vmatprep.subr.bf16.mxu0 0
    %1085 = vmatpush1.bf16.xpose.msra.mxu0 0
    %1086 = vmatprep.mubr.bf16.mxu0 0
    %1087 = vmatmul.mubr.bf16.gmra.mrb[0].mxu0 %v1049
    %v1088 = vpop.f32.mrb[0].mxu0
    %v1089 = vadd.f32 0.0, %v1088
    %v1090 = vpop.f32.mrb[0].mxu0
    %v1091 = vpop.f32.mrb[0].mxu0
    %v1092 = vpop.f32.mrb[0].mxu0
    %1093 = vdwg.mxu0
    %1094 = vrot.lane.b32.xlu0 %v232, 104
    %v1095 = vpop.permute.xlu0 %1094
    %1096 = vrot.lane.b32.xlu0 %v234, 104
    %v1097 = vpop.permute.xlu0 %1096
    %v1099 = vsel %vm235, %v1095, 0
    %v1102 = vsel %vm235, %v1097, 0
    %1104 = vmatprep.subr.bf16.mxu0 0
    %1105 = vmatpush1.bf16.xpose.msra.mxu0 %v1102
    %1106 = vmatprep.subr.bf16.mxu0 0
    %1107 = vmatpush1.bf16.xpose.msra.mxu0 0
    %1108 = vmatprep.subr.bf16.mxu0 0
    %1109 = vmatpush1.bf16.xpose.msra.mxu0 0
    %1110 = vmatprep.subr.bf16.mxu0 0
    %1111 = vmatpush1.bf16.xpose.msra.mxu0 0
    %1112 = vmatprep.subr.bf16.mxu0 0
    %1113 = vmatpush1.bf16.xpose.msra.mxu0 0
    %1114 = vmatprep.subr.bf16.mxu0 0
    %1115 = vmatpush1.bf16.xpose.msra.mxu0 0
    %1116 = vmatprep.subr.bf16.mxu0 0
    %1117 = vmatpush1.bf16.xpose.msra.mxu0 0
    %1118 = vmatprep.subr.bf16.mxu0 0
    %1119 = vmatpush1.bf16.xpose.msra.mxu0 0
    %1120 = vmatprep.subr.bf16.mxu0 0
    %1121 = vmatpush1.bf16.xpose.msra.mxu0 0
    %1122 = vmatprep.subr.bf16.mxu0 0
    %1123 = vmatpush1.bf16.xpose.msra.mxu0 0
    %1124 = vmatprep.subr.bf16.mxu0 0
    %1125 = vmatpush1.bf16.xpose.msra.mxu0 0
    %1126 = vmatprep.subr.bf16.mxu0 0
    %1127 = vmatpush1.bf16.xpose.msra.mxu0 0
    %1128 = vmatprep.subr.bf16.mxu0 0
    %1129 = vmatpush1.bf16.xpose.msra.mxu0 0
    %1130 = vmatprep.subr.bf16.mxu0 0
    %1131 = vmatpush1.bf16.xpose.msra.mxu0 0
    %1132 = vmatprep.subr.bf16.mxu0 0
    %1133 = vmatpush1.bf16.xpose.msra.mxu0 0
    %1134 = vmatprep.subr.bf16.mxu0 0
    %1135 = vmatpush1.bf16.xpose.msra.mxu0 0
    %1136 = vmatprep.mubr.bf16.mxu0 0
    %1137 = vmatmul.mubr.bf16.gmra.mrb[0].mxu0 %v1099
    %v1138 = vpop.f32.mrb[0].mxu0
    %v1139 = vadd.f32 0.0, %v1138
    %v1140 = vpop.f32.mrb[0].mxu0
    %v1141 = vpop.f32.mrb[0].mxu0
    %v1142 = vpop.f32.mrb[0].mxu0
    %1143 = vdwg.mxu0
    %v1144 = vsel %vm235, %v1089, -inf
    %1145 = vmax.xlane.f32.xlu0 %v1144
    %v1146 = vpop.xlane.xlu0 %1145
    %v1147 = vsel %vm235, %v1139, -inf
    %1148 = vmax.xlane.f32.xlu0 %v1147
    %v1149 = vpop.xlane.xlu0 %1148
    %v1150 = vsub.f32 %v1089, %v1146
    %v1151 = vsub.f32 %v1139, %v1149
    %v1152 = vmul.f32 %v1150, 1.442695
    %v1153 = vpow.pop %v1152
    %v1154 = vmul.f32 %v1151, 1.442695
    %v1155 = vpow.pop %v1154
    %v1156 = vsel %vm235, %v1153, 0.0
    %1157 = vadd.xlane.f32.xlu0 %v1156
    %v1158 = vpop.xlane.xlu0 %1157
    %v1159 = vsel %vm235, %v1155, 0.0
    %1160 = vadd.xlane.f32.xlu0 %v1159
    %v1161 = vpop.xlane.xlu0 %1160
    %v1162 = vrcp.pop %v1158
    %v1163 = vrcp.pop %v1161
    %v1164 = vmul.f32 %v1153, %v1162
    %v1165 = vmul.f32 %v1155, %v1163
    %v1166 = vpack.c.bf16 %v1164, %v1164
    %v1167 = vpack.c.bf16 %v1165, %v1165
    %1168 = vrot.lane.b32.xlu0 %v233, 72
    %v1169 = vpop.permute.xlu0 %1168
    %v1171 = vsel %vm235, %v1166, 0
    %v1174 = vsel %vm358, %v1169, 0
    %1176 = vmatprep.subr.bf16.mxu0 0
    %1177 = vmatpush1.bf16.msra.mxu0 %v1174
    %1178 = vmatprep.subr.bf16.mxu0 0
    %1179 = vmatpush1.bf16.msra.mxu0 0
    %1180 = vmatprep.subr.bf16.mxu0 0
    %1181 = vmatpush1.bf16.msra.mxu0 0
    %1182 = vmatprep.subr.bf16.mxu0 0
    %1183 = vmatpush1.bf16.msra.mxu0 0
    %1184 = vmatprep.subr.bf16.mxu0 0
    %1185 = vmatpush1.bf16.msra.mxu0 0
    %1186 = vmatprep.subr.bf16.mxu0 0
    %1187 = vmatpush1.bf16.msra.mxu0 0
    %1188 = vmatprep.subr.bf16.mxu0 0
    %1189 = vmatpush1.bf16.msra.mxu0 0
    %1190 = vmatprep.subr.bf16.mxu0 0
    %1191 = vmatpush1.bf16.msra.mxu0 0
    %1192 = vmatprep.subr.bf16.mxu0 0
    %1193 = vmatpush1.bf16.msra.mxu0 0
    %1194 = vmatprep.subr.bf16.mxu0 0
    %1195 = vmatpush1.bf16.msra.mxu0 0
    %1196 = vmatprep.subr.bf16.mxu0 0
    %1197 = vmatpush1.bf16.msra.mxu0 0
    %1198 = vmatprep.subr.bf16.mxu0 0
    %1199 = vmatpush1.bf16.msra.mxu0 0
    %1200 = vmatprep.subr.bf16.mxu0 0
    %1201 = vmatpush1.bf16.msra.mxu0 0
    %1202 = vmatprep.subr.bf16.mxu0 0
    %1203 = vmatpush1.bf16.msra.mxu0 0
    %1204 = vmatprep.subr.bf16.mxu0 0
    %1205 = vmatpush1.bf16.msra.mxu0 0
    %1206 = vmatprep.subr.bf16.mxu0 0
    %1207 = vmatpush1.bf16.msra.mxu0 0
    %1208 = vmatprep.mubr.bf16.mxu0 0
    %1209 = vmatmul.mubr.bf16.gmra.mrb[0].mxu0 %v1171
    %v1210 = vpop.f32.mrb[0].mxu0
    %v1211 = vadd.f32 0.0, %v1210
    %v1212 = vpop.f32.mrb[0].mxu0
    %v1213 = vpop.f32.mrb[0].mxu0
    %v1214 = vpop.f32.mrb[0].mxu0
    %1215 = vdwg.mxu0
    %1216 = vrot.lane.b32.xlu0 %v234, 72
    %v1217 = vpop.permute.xlu0 %1216
    %v1219 = vsel %vm235, %v1167, 0
    %v1222 = vsel %vm358, %v1217, 0
    %1224 = vmatprep.subr.bf16.mxu0 0
    %1225 = vmatpush1.bf16.msra.mxu0 %v1222
    %1226 = vmatprep.subr.bf16.mxu0 0
    %1227 = vmatpush1.bf16.msra.mxu0 0
    %1228 = vmatprep.subr.bf16.mxu0 0
    %1229 = vmatpush1.bf16.msra.mxu0 0
    %1230 = vmatprep.subr.bf16.mxu0 0
    %1231 = vmatpush1.bf16.msra.mxu0 0
    %1232 = vmatprep.subr.bf16.mxu0 0
    %1233 = vmatpush1.bf16.msra.mxu0 0
    %1234 = vmatprep.subr.bf16.mxu0 0
    %1235 = vmatpush1.bf16.msra.mxu0 0
    %1236 = vmatprep.subr.bf16.mxu0 0
    %1237 = vmatpush1.bf16.msra.mxu0 0
    %1238 = vmatprep.subr.bf16.mxu0 0
    %1239 = vmatpush1.bf16.msra.mxu0 0
    %1240 = vmatprep.subr.bf16.mxu0 0
    %1241 = vmatpush1.bf16.msra.mxu0 0
    %1242 = vmatprep.subr.bf16.mxu0 0
    %1243 = vmatpush1.bf16.msra.mxu0 0
    %1244 = vmatprep.subr.bf16.mxu0 0
    %1245 = vmatpush1.bf16.msra.mxu0 0
    %1246 = vmatprep.subr.bf16.mxu0 0
    %1247 = vmatpush1.bf16.msra.mxu0 0
    %1248 = vmatprep.subr.bf16.mxu0 0
    %1249 = vmatpush1.bf16.msra.mxu0 0
    %1250 = vmatprep.subr.bf16.mxu0 0
    %1251 = vmatpush1.bf16.msra.mxu0 0
    %1252 = vmatprep.subr.bf16.mxu0 0
    %1253 = vmatpush1.bf16.msra.mxu0 0
    %1254 = vmatprep.subr.bf16.mxu0 0
    %1255 = vmatpush1.bf16.msra.mxu0 0
    %1256 = vmatprep.mubr.bf16.mxu0 0
    %1257 = vmatmul.mubr.bf16.gmra.mrb[0].mxu0 %v1219
    %v1258 = vpop.f32.mrb[0].mxu0
    %v1259 = vadd.f32 0.0, %v1258
    %v1260 = vpop.f32.mrb[0].mxu0
    %v1261 = vpop.f32.mrb[0].mxu0
    %v1262 = vpop.f32.mrb[0].mxu0
    %1263 = vdwg.mxu0
    %v1264 = vpack.c.bf16 %v1259, %v1211
    %s1265 = scalar_lea.vmem %s6, 12
    %v1266 = vld [vmem:[%s1265] sm:$0xf]
    %v1268 = vsel %vm235, %v1264, 0
    %v1271 = vsel %vm358, %v1266, 0
    %1273 = vmatprep.subr.bf16.mxu0 0
    %1274 = vmatpush1.bf16.msra.mxu0 %v1271
    %1275 = vmatprep.subr.bf16.mxu0 0
    %1276 = vmatpush1.bf16.msra.mxu0 0
    %1277 = vmatprep.subr.bf16.mxu0 0
    %1278 = vmatpush1.bf16.msra.mxu0 0
    %1279 = vmatprep.subr.bf16.mxu0 0
    %1280 = vmatpush1.bf16.msra.mxu0 0
    %1281 = vmatprep.subr.bf16.mxu0 0
    %1282 = vmatpush1.bf16.msra.mxu0 0
    %1283 = vmatprep.subr.bf16.mxu0 0
    %1284 = vmatpush1.bf16.msra.mxu0 0
    %1285 = vmatprep.subr.bf16.mxu0 0
    %1286 = vmatpush1.bf16.msra.mxu0 0
    %1287 = vmatprep.subr.bf16.mxu0 0
    %1288 = vmatpush1.bf16.msra.mxu0 0
    %1289 = vmatprep.subr.bf16.mxu0 0
    %1290 = vmatpush1.bf16.msra.mxu0 0
    %1291 = vmatprep.subr.bf16.mxu0 0
    %1292 = vmatpush1.bf16.msra.mxu0 0
    %1293 = vmatprep.subr.bf16.mxu0 0
    %1294 = vmatpush1.bf16.msra.mxu0 0
    %1295 = vmatprep.subr.bf16.mxu0 0
    %1296 = vmatpush1.bf16.msra.mxu0 0
    %1297 = vmatprep.subr.bf16.mxu0 0
    %1298 = vmatpush1.bf16.msra.mxu0 0
    %1299 = vmatprep.subr.bf16.mxu0 0
    %1300 = vmatpush1.bf16.msra.mxu0 0
    %1301 = vmatprep.subr.bf16.mxu0 0
    %1302 = vmatpush1.bf16.msra.mxu0 0
    %1303 = vmatprep.subr.bf16.mxu0 0
    %1304 = vmatpush1.bf16.msra.mxu0 0
    %1305 = vmatprep.mubr.bf16.mxu0 0
    %1306 = vmatmul.mubr.bf16.gmra.mrb[0].mxu0 %v1268
    %v1307 = vpop.f32.mrb[0].mxu0
    %v1308 = vadd.f32 0.0, %v1307
    %v1309 = vpop.f32.mrb[0].mxu0
    %v1310 = vpop.f32.mrb[0].mxu0
    %v1311 = vadd.f32 0.0, %v1310
    %v1312 = vpop.f32.mrb[0].mxu0
    %1313 = vdwg.mxu0
    %v1314 = vadd.f32 %v1042, %v1308
    %v1315 = vadd.f32 %v1043, %v1311
    %v1316 = vld [vmem:[#allocation2] sm:$0x1]
    %v1318 = vlaneseq
    %v1319 = vshrl.u32 %v1318, 7
    %v1320 = vsub.s32 0, %v1319
    %v1321 = vrot.slane %v1316, %v1320
    %v1323 = vadd.f32 %v1314, %v1321
    %v1324 = vadd.f32 %v1315, %v1321
    %v1325 = vadd.f32 %v90, %v1323
    %v1326 = vadd.f32 %v91, %v1324
    %v1327 = vld [vmem:[#allocation5] sm:$0x1]
    %v1328 = vld [vmem:[#allocation7] sm:$0x1]
    %v1329 = vsel %vm118, %v1325, 0.0
    %1330 = vadd.xlane.f32.xlu0 %v1329
    %v1331 = vpop.xlane.xlu0 %1330
    %v1332 = vsel %vm118, %v1326, 0.0
    %1333 = vadd.xlane.f32.xlu0 %v1332
    %v1334 = vpop.xlane.xlu0 %1333
    %v1335 = vrcp.pop 32.0
    %v1336 = vmul.f32 %v1331, %v1335
    %v1337 = vmul.f32 %v1334, %v1335
    %v1338 = vsub.f32 %v1325, %v1336
    %v1339 = vsub.f32 %v1326, %v1337
    %v1340 = vmul.f32 %v1338, %v1338
    %v1341 = vmul.f32 %v1339, %v1339
    %v1342 = vsel %vm118, %v1340, 0.0
    %1343 = vadd.xlane.f32.xlu0 %v1342
    %v1344 = vpop.xlane.xlu0 %1343
    %v1345 = vsel %vm118, %v1341, 0.0
    %1346 = vadd.xlane.f32.xlu0 %v1345
    %v1347 = vpop.xlane.xlu0 %1346
    %v1348 = vmul.f32 %v1344, %v1335
    %v1349 = vmul.f32 %v1347, %v1335
    %v1350 = vadd.f32 %v1348, 1e-05
    %v1351 = vadd.f32 %v1349, 1e-05
    %v1352 = vrsqrt.pop %v1350
    %v1353 = vrsqrt.pop %v1351
    %v1354 = vmul.f32 %v1338, %v1352
    %v1355 = vmul.f32 %v1339, %v1353
    %v1357 = vlaneseq
    %v1358 = vshrl.u32 %v1357, 7
    %v1359 = vsub.s32 0, %v1358
    %v1360 = vrot.slane %v1327, %v1359
    %v1362 = vmul.f32 %v1354, %v1360
    %v1363 = vmul.f32 %v1355, %v1360
    %v1365 = vlaneseq
    %v1366 = vshrl.u32 %v1365, 7
    %v1367 = vsub.s32 0, %v1366
    %v1368 = vrot.slane %v1328, %v1367
    %v1370 = vadd.f32 %v1362, %v1368
    %v1371 = vadd.f32 %v1363, %v1368
    %v1372 = vpack.c.bf16 %v1371, %v1370
    %v1373 = vld [vmem:[%s10] sm:$0xf]
    %v1374 = vld [vmem:[%s10 + $0x4] sm:$0xf]
    %v1375 = vld [vmem:[%s10 + $0x8] sm:$0xf]
    %v1376 = vld [vmem:[%s10 + $0xc] sm:$0xf]
    %v1377 = vld [vmem:[%s11] sm:$0x1]
    %v1379 = vlaneseq
    %v1380 = vshrl.u32 %v1379, 7
    %v1381 = vsub.s32 0, %v1380
    %v1382 = vrot.slane %v1377, %v1381
    %v1388 = vunpack.c.l.b16 %v1373
    %v1389 = vunpack.c.l.b16 %v1374
    %v1390 = vunpack.c.l.b16 %v1375
    %v1391 = vunpack.c.l.b16 %v1376
    %v1392 = vpack.c.b16 %v1389, %v1388
    %v1393 = vpack.c.b16 %v1391, %v1390
    %v1397 = vsel %vm118, %v1372, 0
    %1399 = vmatprep.subr.bf16.mxu0 0
    %1400 = vmatpush1.bf16.msra.mxu0 %v1392
    %1401 = vmatprep.subr.bf16.mxu0 0
    %1402 = vmatpush1.bf16.msra.mxu0 %v1393
    %1403 = vmatprep.subr.bf16.mxu0 0
    %1404 = vmatpush1.bf16.msra.mxu0 0
    %1405 = vmatprep.subr.bf16.mxu0 0
    %1406 = vmatpush1.bf16.msra.mxu0 0
    %1407 = vmatprep.subr.bf16.mxu0 0
    %1408 = vmatpush1.bf16.msra.mxu0 0
    %1409 = vmatprep.subr.bf16.mxu0 0
    %1410 = vmatpush1.bf16.msra.mxu0 0
    %1411 = vmatprep.subr.bf16.mxu0 0
    %1412 = vmatpush1.bf16.msra.mxu0 0
    %1413 = vmatprep.subr.bf16.mxu0 0
    %1414 = vmatpush1.bf16.msra.mxu0 0
    %1415 = vmatprep.subr.bf16.mxu0 0
    %1416 = vmatpush1.bf16.msra.mxu0 0
    %1417 = vmatprep.subr.bf16.mxu0 0
    %1418 = vmatpush1.bf16.msra.mxu0 0
    %1419 = vmatprep.subr.bf16.mxu0 0
    %1420 = vmatpush1.bf16.msra.mxu0 0
    %1421 = vmatprep.subr.bf16.mxu0 0
    %1422 = vmatpush1.bf16.msra.mxu0 0
    %1423 = vmatprep.subr.bf16.mxu0 0
    %1424 = vmatpush1.bf16.msra.mxu0 0
    %1425 = vmatprep.subr.bf16.mxu0 0
    %1426 = vmatpush1.bf16.msra.mxu0 0
    %1427 = vmatprep.subr.bf16.mxu0 0
    %1428 = vmatpush1.bf16.msra.mxu0 0
    %1429 = vmatprep.subr.bf16.mxu0 0
    %1430 = vmatpush1.bf16.msra.mxu0 0
    %1431 = vmatprep.mubr.bf16.mxu0 0
    %1432 = vmatmul.mubr.bf16.gmra.mrb[0].mxu0 %v1397
    %v1433 = vpop.f32.mrb[0].mxu0
    %v1434 = vadd.f32 %v1382, %v1433
    %v1435 = vpop.f32.mrb[0].mxu0
    %v1436 = vpop.f32.mrb[0].mxu0
    %v1437 = vadd.f32 %v1382, %v1436
    %v1438 = vpop.f32.mrb[0].mxu0
    %1439 = vdwg.mxu0
    %v1440 = vmax.f32 %v1434, 0.0
    %v1441 = vmax.f32 %v1437, 0.0
    %v1442 = vpack.c.bf16 %v1441, %v1440
    %v1443 = vld [vmem:[%s12] sm:$0xf]
    %v1444 = vld [vmem:[%s12 + $0x4] sm:$0xf]
    %v1445 = vld [vmem:[%s12 + $0x8] sm:$0xf]
    %v1446 = vld [vmem:[%s12 + $0xc] sm:$0xf]
    %v1447 = vld [vmem:[%s12 + $0x10] sm:$0xf]
    %v1448 = vld [vmem:[%s12 + $0x14] sm:$0xf]
    %v1449 = vld [vmem:[%s12 + $0x18] sm:$0xf]
    %v1450 = vld [vmem:[%s12 + $0x1c] sm:$0xf]
    %v1451 = vld [vmem:[%s12 + $0x20] sm:$0xf]
    %v1452 = vld [vmem:[%s12 + $0x24] sm:$0xf]
    %v1453 = vld [vmem:[%s12 + $0x28] sm:$0xf]
    %v1454 = vld [vmem:[%s12 + $0x2c] sm:$0xf]
    %v1455 = vld [vmem:[%s12 + $0x30] sm:$0xf]
    %v1456 = vld [vmem:[%s12 + $0x34] sm:$0xf]
    %v1457 = vld [vmem:[%s12 + $0x38] sm:$0xf]
    %v1458 = vld [vmem:[%s12 + $0x3c] sm:$0xf]
    %v1459 = vld [vmem:[%s13] sm:$0x1]
    %v1461 = vlaneseq
    %v1462 = vshrl.u32 %v1461, 7
    %v1463 = vsub.s32 0, %v1462
    %v1464 = vrot.slane %v1459, %v1463
    %v1482 = vunpack.c.l.b16 %v1443
    %v1483 = vunpack.c.l.b16 %v1444
    %v1484 = vunpack.c.l.b16 %v1445
    %v1485 = vunpack.c.l.b16 %v1446
    %v1486 = vunpack.c.l.b16 %v1447
    %v1487 = vunpack.c.l.b16 %v1448
    %v1488 = vunpack.c.l.b16 %v1449
    %v1489 = vunpack.c.l.b16 %v1450
    %v1490 = vunpack.c.l.b16 %v1451
    %v1491 = vunpack.c.l.b16 %v1452
    %v1492 = vunpack.c.l.b16 %v1453
    %v1493 = vunpack.c.l.b16 %v1454
    %v1494 = vunpack.c.l.b16 %v1455
    %v1495 = vunpack.c.l.b16 %v1456
    %v1496 = vunpack.c.l.b16 %v1457
    %v1497 = vunpack.c.l.b16 %v1458
    %v1498 = vpack.c.b16 %v1483, %v1482
    %v1499 = vpack.c.b16 %v1485, %v1484
    %v1500 = vpack.c.b16 %v1487, %v1486
    %v1501 = vpack.c.b16 %v1489, %v1488
    %v1502 = vpack.c.b16 %v1491, %v1490
    %v1503 = vpack.c.b16 %v1493, %v1492
    %v1504 = vpack.c.b16 %v1495, %v1494
    %v1505 = vpack.c.b16 %v1497, %v1496
    %1514 = vmatprep.subr.bf16.mxu0 0
    %1515 = vmatpush1.bf16.msra.mxu0 %v1498
    %1516 = vmatprep.subr.bf16.mxu0 0
    %1517 = vmatpush1.bf16.msra.mxu0 %v1499
    %1518 = vmatprep.subr.bf16.mxu0 0
    %1519 = vmatpush1.bf16.msra.mxu0 %v1500
    %1520 = vmatprep.subr.bf16.mxu0 0
    %1521 = vmatpush1.bf16.msra.mxu0 %v1501
    %1522 = vmatprep.subr.bf16.mxu0 0
    %1523 = vmatpush1.bf16.msra.mxu0 %v1502
    %1524 = vmatprep.subr.bf16.mxu0 0
    %1525 = vmatpush1.bf16.msra.mxu0 %v1503
    %1526 = vmatprep.subr.bf16.mxu0 0
    %1527 = vmatpush1.bf16.msra.mxu0 %v1504
    %1528 = vmatprep.subr.bf16.mxu0 0
    %1529 = vmatpush1.bf16.msra.mxu0 %v1505
    %1530 = vmatprep.subr.bf16.mxu0 0
    %1531 = vmatpush1.bf16.msra.mxu0 0
    %1532 = vmatprep.subr.bf16.mxu0 0
    %1533 = vmatpush1.bf16.msra.mxu0 0
    %1534 = vmatprep.subr.bf16.mxu0 0
    %1535 = vmatpush1.bf16.msra.mxu0 0
    %1536 = vmatprep.subr.bf16.mxu0 0
    %1537 = vmatpush1.bf16.msra.mxu0 0
    %1538 = vmatprep.subr.bf16.mxu0 0
    %1539 = vmatpush1.bf16.msra.mxu0 0
    %1540 = vmatprep.subr.bf16.mxu0 0
    %1541 = vmatpush1.bf16.msra.mxu0 0
    %1542 = vmatprep.subr.bf16.mxu0 0
    %1543 = vmatpush1.bf16.msra.mxu0 0
    %1544 = vmatprep.subr.bf16.mxu0 0
    %1545 = vmatpush1.bf16.msra.mxu0 0
    %1546 = vmatprep.mubr.bf16.mxu0 0
    %1547 = vmatmul.mubr.bf16.gmra.mrb[0].mxu0 %v1442
    %v1548 = vpop.f32.mrb[0].mxu0
    %v1549 = vadd.f32 %v1464, %v1548
    %v1550 = vpop.f32.mrb[0].mxu0
    %v1551 = vpop.f32.mrb[0].mxu0
    %v1552 = vadd.f32 %v1464, %v1551
    %v1553 = vpop.f32.mrb[0].mxu0
    %1554 = vdwg.mxu0
    %v1555 = vadd.f32 %v1370, %v1549
    %v1556 = vadd.f32 %v1371, %v1552
    %v1557 = vld [vmem:[%s14] sm:$0x1]
    %v1558 = vld [vmem:[%s15] sm:$0x1]
    %v1559 = vsel %vm118, %v1555, 0.0
    %1560 = vadd.xlane.f32.xlu0 %v1559
    %v1561 = vpop.xlane.xlu0 %1560
    %v1562 = vsel %vm118, %v1556, 0.0
    %1563 = vadd.xlane.f32.xlu0 %v1562
    %v1564 = vpop.xlane.xlu0 %1563
    %v1565 = vmul.f32 %v1561, %v1335
    %v1566 = vmul.f32 %v1564, %v1335
    %v1567 = vsub.f32 %v1555, %v1565
    %v1568 = vsub.f32 %v1556, %v1566
    %v1569 = vmul.f32 %v1567, %v1567
    %v1570 = vmul.f32 %v1568, %v1568
    %v1571 = vsel %vm118, %v1569, 0.0
    %1572 = vadd.xlane.f32.xlu0 %v1571
    %v1573 = vpop.xlane.xlu0 %1572
    %v1574 = vsel %vm118, %v1570, 0.0
    %1575 = vadd.xlane.f32.xlu0 %v1574
    %v1576 = vpop.xlane.xlu0 %1575
    %v1577 = vmul.f32 %v1573, %v1335
    %v1578 = vmul.f32 %v1576, %v1335
    %v1579 = vadd.f32 %v1577, 1e-05
    %v1580 = vadd.f32 %v1578, 1e-05
    %v1581 = vrsqrt.pop %v1579
    %v1582 = vrsqrt.pop %v1580
    %v1583 = vmul.f32 %v1567, %v1581
    %v1584 = vmul.f32 %v1568, %v1582
    %v1586 = vlaneseq
    %v1587 = vshrl.u32 %v1586, 7
    %v1588 = vsub.s32 0, %v1587
    %v1589 = vrot.slane %v1557, %v1588
    %v1591 = vmul.f32 %v1583, %v1589
    %v1592 = vmul.f32 %v1584, %v1589
    %v1594 = vlaneseq
    %v1595 = vshrl.u32 %v1594, 7
    %v1596 = vsub.s32 0, %v1595
    %v1597 = vrot.slane %v1558, %v1596
    %v1599 = vadd.f32 %v1591, %v1597
    %v1600 = vadd.f32 %v1592, %v1597
    %1601 = vst.msk [vmem:[#allocation8] sm:$0xff] %vm118, %v1599
    %1602 = vst.msk [vmem:[#allocation8 + $0x8] sm:$0xff] %vm118, %v1600
    // Predicated region
    $region78: #{tpu_custom_call.1} parent=1 // pred_check
      _
    $region79: #{tpu_custom_call.1} parent=1 // pred_check_branch
      %1604 = sbr.rel (0) target = $region81
    $region80: #{tpu_custom_call.1} parent=1 // pred_region
      %s1606 = ssub.s32 256, 256
      %1607 = vsyncadd [#allocation4], %s1606
      %s1608 = sshll.u32 [#allocation8], 4
      %s1609 = int_to_ptr.vmem [resolvable:$true] %s1608
      %1614 = dma.vmem_to_hbm [thread:$0]  %s1609, 256, %s16, [#allocation4], 128, 128, 8
    $region81: #{tpu_custom_call.1} parent=1 // pred_fallthru
      _
    // Predicated region
    $region82: #{tpu_custom_call.1} parent=1 // pred_check
      _
    $region83: #{tpu_custom_call.1} parent=1 // pred_check_branch
      %1616 = sbr.rel (0) target = $region85
    $region84: #{tpu_custom_call.1} parent=1 // pred_region
      %1617 = dma.done [#allocation4], 256
    $region85: #{tpu_custom_call.1} parent=1 // pred_fallthru
      _
    %1618 = vsyncpa [#allocation3], 1
    %1619 = vsyncpa [#allocation6], 1
    %1620 = vsyncpa [#allocation4], 1

</llo_original>
